<compile_context>
chip_gen: v7x
topology: tpu7x:2x2x1
jax: 0.10.0
libtpu: 0.0.40
codegen_flags: <defaults>
</compile_context>

<pallas_src>
import functools
import math

import numpy as np

import jax
import jax.numpy as jnp
from jax.experimental import pallas as pl
from jax.experimental.pallas import tpu as pltpu

DIM = 8                         # distribution.dim
NUM_PARAMS = 1 + 2 * DIM        # log-prior + mean + hidden log-variance
SAMPLE_SIZE = 16                # config["sample_size"] (default)
LOG_EPS = -100.0
LOG2PI = math.log(2.0 * math.pi)
# train_epsilon=True: hidden_epsilon is a Parameter initialized to 0.01 ** (2 / dim);
# variance property = exp(hidden_epsilon).  Deterministic init, no checkpoint load.
HIDDEN_EPSILON = 0.01 ** (2.0 / DIM)
VARIANCE_EPS = math.exp(HIDDEN_EPSILON)


def _round_up(x, m):
    return (x + m - 1) // m * m


def _pick_tile(nq, s, l, d, itemsize=4, budget=24 * 1024 * 1024):
    """Largest query tile (multiple of 128) whose working set fits a conservative VMEM budget.

    Working set per query lane ~= double-buffered noise block + ~4 same-sized f32 live
    intermediates, all of size S*L*D per query.
    """
    per_q = (2 + 4) * s * l * d * itemsize + 32 * d * itemsize
    tq = max(128, (budget // max(per_q, 1)) // 128 * 128)
    if nq > 128:
        # keep at least two grid steps so the "parallel" axis can feed both v7x TensorCores
        tq = min(tq, _round_up((nq + 1) // 2, 128))
    else:
        tq = 128
    return int(tq)


# ----------------------------------------------------------------------------------
# Pallas kernel: lane-dense SPE logits for one tile of TQ queries.
#   q_mean/q_hvar : (D, TQ)        s_mean/s_hvar : (Bs, L, D)
#   noise         : (S, L, D, TQ)  out           : (L, TQ)
# ----------------------------------------------------------------------------------
def _spe_logits_kernel(q_mean_ref, q_hvar_ref, s_mean_ref, s_hvar_ref, noise_ref, out_ref,
                       *, eps, sample_size):
    f32 = jnp.float32
    q_mean = q_mean_ref[...].astype(f32)            # (D, TQ)
    q_hvar = q_hvar_ref[...].astype(f32)
    s_mean = s_mean_ref[...].astype(f32)            # (Bs, L, D)
    s_hvar = s_hvar_ref[...].astype(f32)

    q_var = jnp.exp(q_hvar)                         # positive() == exp        (D, TQ)

    # ---- _compute_prototypes: precision-weighted fusion over the support batch (tiny) ----
    s_var = eps + jnp.exp(s_hvar)                   # variance + positive(hidden_var)
    inv_s_var = 1.0 / s_var
    new_var = 1.0 / jnp.sum(inv_s_var, axis=0)      # (L, D)
    p_mean = new_var * jnp.sum(s_mean * inv_s_var, axis=0)   # (L, D)
    p_var = eps + new_var                           # positive(ipositive(eps + new_var))
    inv_p_var = 1.0 / p_var                         # (L, D)
    # hoisted constant of the prototype logpdf: -0.5 * sum_d(log2pi + log(p_var))
    c_l = -0.5 * jnp.sum(LOG2PI + jnp.log(p_var), axis=-1, keepdims=True)     # (L, 1)

    # ---- pdf_product(query, prototype) for every (class, query) pair ----
    inv_q_var = 1.0 / q_var                         # (D, TQ)
    qv = q_var[None, :, :]                          # (1, D, TQ)
    qm = q_mean[None, :, :]
    pv = p_var[:, :, None]                          # (L, D, 1)
    pm = p_mean[:, :, None]
    inv_qv = inv_q_var[None, :, :]
    inv_pv = inv_p_var[:, :, None]

    prod_var = 1.0 / (inv_qv + inv_pv)              # (L, D, TQ)
    prod_mean = prod_var * (qm * inv_qv + pm * inv_pv)
    base = prod_mean - pm                           # fold the "- p_mean" of the logpdf diff
    scale = jnp.sqrt(prod_var)                      # (L, D, TQ)

    # ---- stochastic samples + logpdf under the matching prototype (the hot loop) ----
    # diff = (prod_mean + sqrt(prod_var)*noise) - p_mean  ==  base + scale*noise
    noise = noise_ref[...].astype(f32)              # (S, L, D, TQ)
    diff = base[None] + scale[None] * noise         # (S, L, D, TQ), mul/add only
    quad = jnp.sum(diff * diff * inv_p_var[None, :, :, None], axis=2)         # (S, L, TQ)
    tgt = c_l[None] - 0.5 * quad                    # (S, L, TQ)

    # ---- logsumexp over classes, then logsumexp of the negation over samples ----
    m1 = jnp.max(tgt, axis=1)                                                 # (S, TQ)
    logdenum = jnp.log(jnp.sum(jnp.exp(tgt - m1[:, None, :]), axis=1)) + m1   # (S, TQ)
    neg = -logdenum
    m2 = jnp.max(neg, axis=0, keepdims=True)                                  # (1, TQ)
    corr = jnp.log(jnp.sum(jnp.exp(neg - m2), axis=0, keepdims=True)) + m2    # (1, TQ)

    # ---- log mutual-likelihood score between query and prototypes ----
    sv = qv + pv                                    # (L, D, TQ)
    dm = qm - pm
    logmls = -0.5 * jnp.sum(LOG2PI + jnp.log(sv) + dm * dm / sv, axis=1)      # (L, TQ)

    out = logmls + corr - math.log(sample_size)     # (L, TQ)
    out_ref[...] = out.astype(out_ref.dtype)


# ----------------------------------------------------------------------------------
# Wrappers.
# ----------------------------------------------------------------------------------
def spe_compute_logits_pallas(query, support, noise):
    """query: (Bq, L, P), support: (Bs, L, P), noise: (S, L, D, Bq*L) -> (Bq, L, L) logits."""
    bq, l, p = query.shape
    d = (p - 1) // 2
    nq = bq * l
    s = int(noise.shape[0])
    bs = support.shape[0]
    dtype = query.dtype

    # split parameters; relayout queries lane-dense (query index in lanes)
    qflat = query.reshape(nq, p)
    q_mean = qflat[:, 1:1 + d].T            # (D, Nq)
    q_hvar = qflat[:, 1 + d:].T             # (D, Nq)
    s_mean = support[:, :, 1:1 + d]         # (Bs, L, D)
    s_hvar = support[:, :, 1 + d:]

    tq = _pick_tile(nq, s, l, d)
    nq_pad = _round_up(max(nq, tq), tq)
    pad = nq_pad - nq
    if pad:
        # padded query lanes are independent of valid lanes (no reduction over queries)
        q_mean = jnp.pad(q_mean, ((0, 0), (0, pad)))
        q_hvar = jnp.pad(q_hvar, ((0, 0), (0, pad)))
        noise = jnp.pad(noise, ((0, 0), (0, 0), (0, 0), (0, pad)))

    kernel = functools.partial(_spe_logits_kernel, eps=VARIANCE_EPS, sample_size=s)
    out = pl.pallas_call(
        kernel,
        grid=(nq_pad // tq,),
        in_specs=[
            pl.BlockSpec((d, tq), lambda i: (0, i)),            # q_mean
            pl.BlockSpec((d, tq), lambda i: (0, i)),            # q_hvar
            pl.BlockSpec((bs, l, d), lambda i: (0, 0, 0)),      # s_mean (whole, tiny)
            pl.BlockSpec((bs, l, d), lambda i: (0, 0, 0)),      # s_hvar (whole, tiny)
            pl.BlockSpec((s, l, d, tq), lambda i: (0, 0, 0, i)),  # noise, tiled over queries
        ],
        out_specs=pl.BlockSpec((l, tq), lambda i: (0, i)),      # lane-dense output
        out_shape=jax.ShapeDtypeStruct((l, nq_pad), dtype),
        compiler_params=pltpu.CompilerParams(
            dimension_semantics=("parallel",),
            vmem_limit_bytes=48 * 1024 * 1024,
        ),
    )(q_mean, q_hvar, s_mean, s_hvar, noise)

    # (L, Nq_pad) -> (Nq, L) -> (Bq, L, L): [query batch, query class, prototype class]
    return out[:, :nq].T.reshape(bq, l, l)


def _spe_logits_math_ref(q_mean, q_hvar, s_mean, s_hvar, noise, *, eps, sample_size):
    """Original (query-first) formulation, used as the pure-JAX reference."""
    q_var = jnp.exp(q_hvar)                                    # (Nq, D)
    s_var = eps + jnp.exp(s_hvar)                              # (Bs, L, D)

    new_var = 1.0 / jnp.sum(1.0 / s_var, axis=0)               # (L, D)
    p_mean = new_var * jnp.sum(s_mean / s_var, axis=0)
    p_var = eps + new_var

    qv = q_var[:, None, :]
    qm = q_mean[:, None, :]
    pv = p_var[None, :, :]
    pm = p_mean[None, :, :]
    prod_var = 1.0 / (1.0 / qv + 1.0 / pv)                     # (Nq, L, D)
    prod_mean = prod_var * (qm / qv + pm / pv)

    z = prod_mean[:, None, :, :] + jnp.sqrt(prod_var)[:, None, :, :] * noise  # (Nq, S, L, D)
    diff = z - p_mean[None, None, :, :]
    tgt = -0.5 * jnp.sum(
        LOG2PI + jnp.log(p_var)[None, None, :, :] + diff * diff / p_var[None, None, :, :],
        axis=-1)                                               # (Nq, S, L)

    m1 = jnp.max(tgt, axis=-1, keepdims=True)
    logdenum = jnp.log(jnp.sum(jnp.exp(tgt - m1), axis=-1)) + m1[..., 0]      # (Nq, S)
    neg = -logdenum
    m2 = jnp.max(neg, axis=-1, keepdims=True)
    corr = jnp.log(jnp.sum(jnp.exp(neg - m2), axis=-1, keepdims=True)) + m2   # (Nq, 1)

    sv = qv + pv
    dm = qm - pm
    logmls = -0.5 * jnp.sum(LOG2PI + jnp.log(sv) + dm * dm / sv, axis=-1)     # (Nq, L)

    return logmls + corr - math.log(sample_size)


def spe_compute_logits_ref(query, support, noise):
    """Pure-JAX (non-Pallas) reference with identical semantics and identical noise."""
    bq, l, p = query.shape
    d = (p - 1) // 2
    nq = bq * l
    qflat = query.reshape(nq, p)
    q_mean = qflat[:, 1:1 + d]
    q_hvar = qflat[:, 1 + d:]
    s_mean = support[:, :, 1:1 + d]
    s_hvar = support[:, :, 1 + d:]
    noise_qfirst = jnp.transpose(noise, (3, 0, 1, 2))          # (Nq, S, L, D)
    logits = _spe_logits_math_ref(q_mean, q_hvar, s_mean, s_hvar, noise_qfirst,
                                  eps=VARIANCE_EPS, sample_size=int(noise.shape[0]))
    return logits.reshape(bq, l, l)


# ----------------------------------------------------------------------------------
# Full forward pass (group-by-class / scatter / un-permute glue around the kernel).
# ----------------------------------------------------------------------------------
def spe_classifier_forward(parameters, labels, num_classes, *, rng_key,
                           compute_logits=spe_compute_logits_pallas):
    if labels is None:
        return jnp.zeros(tuple(parameters.shape[:-1]) + (num_classes,), parameters.dtype)
    if parameters.ndim != 2:
        raise NotImplementedError("Expected embeddings with shape (B, N)")
    labels_np = np.asarray(labels)
    if labels_np.shape != parameters.shape[:-1]:
        raise ValueError("Parameters and labels shape mismatch")

    # _group_by_class (host glue: bincount / unique / nonzero).
    unique = np.unique(labels_np)                                        # sorted label map
    counts = np.array([(labels_np == c).sum() for c in unique])
    if not (counts == counts[0]).all():
        raise RuntimeError("Need uniform balanced sampling: {}".format(counts))
    order = np.stack([np.nonzero(labels_np == c)[0] for c in unique], axis=1)   # (B_per, L)
    l = int(unique.shape[0])
    by_class = parameters[jnp.asarray(order)]                            # (B_per, L, P)
    b_per = by_class.shape[0]
    k = b_per // 2
    d = (parameters.shape[-1] - 1) // 2

    # TODO(synk): sample_size == 0 branch (deterministic product-mean instead of sampling)
    # is not implemented; default config uses sample_size = 16.
    key1, key2 = jax.random.split(rng_key)
    # noise in the kernel's lane-dense layout: (S, L, D, Nq)
    noise1 = jax.random.normal(key1, (SAMPLE_SIZE, l, d, k * l), parameters.dtype)
    noise2 = jax.random.normal(key2, (SAMPLE_SIZE, l, d, (b_per - k) * l), parameters.dtype)

    logits1 = compute_logits(by_class[:k], by_class[k:], noise1)         # (k, L, L)
    logits2 = compute_logits(by_class[k:], by_class[:k], noise2)         # (B_per-k, L, L)
    logits = jnp.concatenate([logits1, logits2], axis=0)                 # (B_per, L, L)

    # scatter into the full class dimension, then undo the group-by-class permutation
    # (torch: all_logits.scatter_(2, label_map.tile(...), logits)).
    all_logits = jnp.full((b_per, l, num_classes), LOG_EPS, parameters.dtype)
    all_logits = all_logits.at[:, :, jnp.asarray(unique)].set(logits)
    all_logits = all_logits.reshape(b_per * l, num_classes)
    inv = np.argsort(order.reshape(-1))
    return all_logits[jnp.asarray(inv)]


if __name__ == "__main__":
    key = jax.random.PRNGKey(0)
    k_params, k_noise = jax.random.split(key)

    num_classes = 6
    present = np.array([0, 2, 3, 5], dtype=np.int32)     # 4 classes present in the batch
    per_class = 4                                         # balanced sampling: 4 per class
    labels_np = np.tile(present, per_class)               # (16,)
    perm = np.array([5, 0, 11, 3, 14, 2, 9, 7, 1, 12, 6, 15, 4, 10, 8, 13])
    labels_np = labels_np[perm]
    labels = jnp.asarray(labels_np)

    params = jax.random.normal(k_params, (labels.shape[0], NUM_PARAMS), jnp.float32)

    out = spe_classifier_forward(params, labels, num_classes, rng_key=k_noise,
                                 compute_logits=spe_compute_logits_pallas)
    out = jax.block_until_ready(out)

    ref = spe_classifier_forward(params, labels, num_classes, rng_key=k_noise,
                                 compute_logits=spe_compute_logits_ref)
    ref = jax.block_until_ready(ref)

    assert out.shape == (labels.shape[0], num_classes)
    np.testing.assert_allclose(np.asarray(out), np.asarray(ref), rtol=2e-3, atol=2e-3)
    print("KERNEL_OK")
</pallas_src>

<mosaic_0001>
module attributes {stable_mosaic.version = 11 : i64} {
  func.func @_spe_logits_kernel(%arg0: i32, %arg1: memref<8x128xf32, #tpu.memory_space<vmem>>, %arg2: memref<8x128xf32, #tpu.memory_space<vmem>>, %arg3: memref<2x4x8xf32, #tpu.memory_space<vmem>>, %arg4: memref<2x4x8xf32, #tpu.memory_space<vmem>>, %arg5: memref<16x4x8x128xf32, #tpu.memory_space<vmem>>, %arg6: memref<4x128xf32, #tpu.memory_space<vmem>>) attributes {dimension_semantics = [#tpu.dimension_semantics<parallel>], iteration_bounds = array<i64: 1>, scalar_prefetch = 0 : i64, scratch_operands = 0 : i64, tpu.core_type = #tpu.core_type<tc>, window_params = [{transform_indices = @transform_0, window_bounds = array<i64: 8, 128>}, {transform_indices = @transform_1, window_bounds = array<i64: 8, 128>}, {pipeline_mode = #tpu.pipeline_mode<synchronous>, transform_indices = @transform_2, window_bounds = array<i64: 2, 4, 8>}, {pipeline_mode = #tpu.pipeline_mode<synchronous>, transform_indices = @transform_3, window_bounds = array<i64: 2, 4, 8>}, {transform_indices = @transform_4, window_bounds = array<i64: 16, 4, 8, 128>}, {transform_indices = @transform_5, window_bounds = array<i64: 4, 128>}]} {
    %c0 = arith.constant 0 : index
    %c0_0 = arith.constant 0 : index
    %0 = vector.load %arg1[%c0, %c0_0] : memref<8x128xf32, #tpu.memory_space<vmem>>, vector<8x128xf32>
    %c0_1 = arith.constant 0 : index
    %c0_2 = arith.constant 0 : index
    %1 = vector.load %arg2[%c0_1, %c0_2] : memref<8x128xf32, #tpu.memory_space<vmem>>, vector<8x128xf32>
    %c0_3 = arith.constant 0 : index
    %c0_4 = arith.constant 0 : index
    %c0_5 = arith.constant 0 : index
    %2 = vector.load %arg3[%c0_3, %c0_4, %c0_5] : memref<2x4x8xf32, #tpu.memory_space<vmem>>, vector<2x4x8xf32>
    %c0_6 = arith.constant 0 : index
    %c0_7 = arith.constant 0 : index
    %c0_8 = arith.constant 0 : index
    %3 = vector.load %arg4[%c0_6, %c0_7, %c0_8] : memref<2x4x8xf32, #tpu.memory_space<vmem>>, vector<2x4x8xf32>
    %4 = math.exp %1 : vector<8x128xf32>
    %5 = math.exp %3 : vector<2x4x8xf32>
    %cst = arith.constant 1.37194276 : f32
    %6 = vector.broadcast %cst : f32 to vector<2x4x8xf32>
    %7 = arith.addf %6, %5 : vector<2x4x8xf32>
    %cst_9 = arith.constant 1.000000e+00 : f32
    %8 = vector.broadcast %cst_9 : f32 to vector<2x4x8xf32>
    %9 = arith.divf %8, %7 : vector<2x4x8xf32>
    %cst_10 = arith.constant dense<0.000000e+00> : vector<4x8xf32>
    %10 = vector.multi_reduction <add>, %9, %cst_10 [0] : vector<2x4x8xf32> to vector<4x8xf32>
    %cst_11 = arith.constant 1.000000e+00 : f32
    %11 = vector.broadcast %cst_11 : f32 to vector<4x8xf32>
    %12 = arith.divf %11, %10 : vector<4x8xf32>
    %13 = arith.mulf %2, %9 : vector<2x4x8xf32>
    %cst_12 = arith.constant dense<0.000000e+00> : vector<4x8xf32>
    %14 = vector.multi_reduction <add>, %13, %cst_12 [0] : vector<2x4x8xf32> to vector<4x8xf32>
    %15 = arith.mulf %12, %14 : vector<4x8xf32>
    %cst_13 = arith.constant 1.37194276 : f32
    %16 = vector.broadcast %cst_13 : f32 to vector<4x8xf32>
    %17 = arith.addf %16, %12 : vector<4x8xf32>
    %cst_14 = arith.constant 1.000000e+00 : f32
    %18 = vector.broadcast %cst_14 : f32 to vector<4x8xf32>
    %19 = arith.divf %18, %17 : vector<4x8xf32>
    %20 = math.log %17 : vector<4x8xf32>
    %cst_15 = arith.constant 1.83787704 : f32
    %21 = vector.broadcast %cst_15 : f32 to vector<4x8xf32>
    %22 = arith.addf %21, %20 : vector<4x8xf32>
    %cst_16 = arith.constant dense<0.000000e+00> : vector<4xf32>
    %23 = vector.multi_reduction <add>, %22, %cst_16 [1] : vector<4x8xf32> to vector<4xf32>
    %24 = vector.shape_cast %23 : vector<4xf32> to vector<4x1xf32>
    %cst_17 = arith.constant -5.000000e-01 : f32
    %25 = vector.broadcast %cst_17 : f32 to vector<4x1xf32>
    %26 = arith.mulf %25, %24 : vector<4x1xf32>
    %cst_18 = arith.constant 1.000000e+00 : f32
    %27 = vector.broadcast %cst_18 : f32 to vector<8x128xf32>
    %28 = arith.divf %27, %4 : vector<8x128xf32>
    %29 = vector.shape_cast %4 : vector<8x128xf32> to vector<1x8x128xf32>
    %30 = vector.shape_cast %0 : vector<8x128xf32> to vector<1x8x128xf32>
    %31 = vector.shape_cast %17 : vector<4x8xf32> to vector<4x8x1xf32>
    %32 = vector.shape_cast %15 : vector<4x8xf32> to vector<4x8x1xf32>
    %33 = vector.shape_cast %28 : vector<8x128xf32> to vector<1x8x128xf32>
    %34 = vector.shape_cast %19 : vector<4x8xf32> to vector<4x8x1xf32>
    %35 = vector.broadcast %33 : vector<1x8x128xf32> to vector<4x8x128xf32>
    %36 = vector.broadcast %34 : vector<4x8x1xf32> to vector<4x8x128xf32>
    %37 = arith.addf %35, %36 : vector<4x8x128xf32>
    %cst_19 = arith.constant 1.000000e+00 : f32
    %38 = vector.broadcast %cst_19 : f32 to vector<4x8x128xf32>
    %39 = arith.divf %38, %37 : vector<4x8x128xf32>
    %40 = arith.mulf %30, %33 : vector<1x8x128xf32>
    %41 = arith.mulf %32, %34 : vector<4x8x1xf32>
    %42 = vector.broadcast %40 : vector<1x8x128xf32> to vector<4x8x128xf32>
    %43 = vector.broadcast %41 : vector<4x8x1xf32> to vector<4x8x128xf32>
    %44 = arith.addf %42, %43 : vector<4x8x128xf32>
    %45 = arith.mulf %39, %44 : vector<4x8x128xf32>
    %46 = vector.broadcast %32 : vector<4x8x1xf32> to vector<4x8x128xf32>
    %47 = arith.subf %45, %46 : vector<4x8x128xf32>
    %48 = math.sqrt %39 : vector<4x8x128xf32>
    %c0_20 = arith.constant 0 : index
    %c0_21 = arith.constant 0 : index
    %c0_22 = arith.constant 0 : index
    %c0_23 = arith.constant 0 : index
    %49 = vector.load %arg5[%c0_20, %c0_21, %c0_22, %c0_23] : memref<16x4x8x128xf32, #tpu.memory_space<vmem>>, vector<16x4x8x128xf32>
    %50 = vector.shape_cast %47 : vector<4x8x128xf32> to vector<1x4x8x128xf32>
    %51 = vector.shape_cast %48 : vector<4x8x128xf32> to vector<1x4x8x128xf32>
    %52 = vector.broadcast %51 : vector<1x4x8x128xf32> to vector<16x4x8x128xf32>
    %53 = arith.mulf %52, %49 : vector<16x4x8x128xf32>
    %54 = vector.broadcast %50 : vector<1x4x8x128xf32> to vector<16x4x8x128xf32>
    %55 = arith.addf %54, %53 : vector<16x4x8x128xf32>
    %56 = arith.mulf %55, %55 : vector<16x4x8x128xf32>
    %57 = vector.shape_cast %19 : vector<4x8xf32> to vector<1x4x8x1xf32>
    %58 = vector.broadcast %57 : vector<1x4x8x1xf32> to vector<16x4x8x128xf32>
    %59 = arith.mulf %56, %58 : vector<16x4x8x128xf32>
    %cst_24 = arith.constant dense<0.000000e+00> : vector<16x4x128xf32>
    %60 = vector.multi_reduction <add>, %59, %cst_24 [2] : vector<16x4x8x128xf32> to vector<16x4x128xf32>
    %61 = vector.shape_cast %26 : vector<4x1xf32> to vector<1x4x1xf32>
    %cst_25 = arith.constant 5.000000e-01 : f32
    %62 = vector.broadcast %cst_25 : f32 to vector<16x4x128xf32>
    %63 = arith.mulf %62, %60 : vector<16x4x128xf32>
    %64 = vector.broadcast %61 : vector<1x4x1xf32> to vector<16x4x128xf32>
    %65 = arith.subf %64, %63 : vector<16x4x128xf32>
    %cst_26 = arith.constant dense<0xFF800000> : vector<16x128xf32>
    %66 = vector.multi_reduction <maximumf>, %65, %cst_26 [1] : vector<16x4x128xf32> to vector<16x128xf32>
    %67 = vector.shape_cast %66 : vector<16x128xf32> to vector<16x1x128xf32>
    %68 = vector.broadcast %67 : vector<16x1x128xf32> to vector<16x4x128xf32>
    %69 = arith.subf %65, %68 : vector<16x4x128xf32>
    %70 = math.exp %69 : vector<16x4x128xf32>
    %cst_27 = arith.constant dense<0.000000e+00> : vector<16x128xf32>
    %71 = vector.multi_reduction <add>, %70, %cst_27 [1] : vector<16x4x128xf32> to vector<16x128xf32>
    %72 = math.log %71 : vector<16x128xf32>
    %73 = arith.addf %72, %66 : vector<16x128xf32>
    %cst_28 = arith.constant 0.000000e+00 : f32
    %74 = vector.broadcast %cst_28 : f32 to vector<16x128xf32>
    %75 = arith.subf %74, %73 : vector<16x128xf32>
    %cst_29 = arith.constant dense<0xFF800000> : vector<128xf32>
    %76 = vector.multi_reduction <maximumf>, %75, %cst_29 [0] : vector<16x128xf32> to vector<128xf32>
    %77 = vector.shape_cast %76 : vector<128xf32> to vector<1x128xf32>
    %78 = vector.broadcast %77 : vector<1x128xf32> to vector<16x128xf32>
    %79 = arith.subf %75, %78 : vector<16x128xf32>
    %80 = math.exp %79 : vector<16x128xf32>
    %cst_30 = arith.constant dense<0.000000e+00> : vector<128xf32>
    %81 = vector.multi_reduction <add>, %80, %cst_30 [0] : vector<16x128xf32> to vector<128xf32>
    %82 = vector.shape_cast %81 : vector<128xf32> to vector<1x128xf32>
    %83 = math.log %82 : vector<1x128xf32>
    %84 = arith.addf %83, %77 : vector<1x128xf32>
    %85 = vector.broadcast %29 : vector<1x8x128xf32> to vector<4x8x128xf32>
    %86 = vector.broadcast %31 : vector<4x8x1xf32> to vector<4x8x128xf32>
    %87 = arith.addf %85, %86 : vector<4x8x128xf32>
    %88 = vector.broadcast %30 : vector<1x8x128xf32> to vector<4x8x128xf32>
    %89 = vector.broadcast %32 : vector<4x8x1xf32> to vector<4x8x128xf32>
    %90 = arith.subf %88, %89 : vector<4x8x128xf32>
    %91 = math.log %87 : vector<4x8x128xf32>
    %cst_31 = arith.constant 1.83787704 : f32
    %92 = vector.broadcast %cst_31 : f32 to vector<4x8x128xf32>
    %93 = arith.addf %92, %91 : vector<4x8x128xf32>
    %94 = arith.mulf %90, %90 : vector<4x8x128xf32>
    %95 = arith.divf %94, %87 : vector<4x8x128xf32>
    %96 = arith.addf %93, %95 : vector<4x8x128xf32>
    %cst_32 = arith.constant dense<0.000000e+00> : vector<4x128xf32>
    %97 = vector.multi_reduction <add>, %96, %cst_32 [1] : vector<4x8x128xf32> to vector<4x128xf32>
    %cst_33 = arith.constant -5.000000e-01 : f32
    %98 = vector.broadcast %cst_33 : f32 to vector<4x128xf32>
    %99 = arith.mulf %98, %97 : vector<4x128xf32>
    %100 = vector.broadcast %84 : vector<1x128xf32> to vector<4x128xf32>
    %101 = arith.addf %99, %100 : vector<4x128xf32>
    %cst_34 = arith.constant 2.77258873 : f32
    %102 = vector.broadcast %cst_34 : f32 to vector<4x128xf32>
    %103 = arith.subf %101, %102 : vector<4x128xf32>
    %c0_35 = arith.constant 0 : index
    %c0_36 = arith.constant 0 : index
    %104 = vector.load %arg6[%c0_35, %c0_36] : memref<4x128xf32, #tpu.memory_space<vmem>>, vector<4x128xf32>
    tpu.vector_store %arg6[%c0_35, %c0_36], %103 {strides = array<i32>} : memref<4x128xf32, #tpu.memory_space<vmem>>, vector<4x128xf32>,
    return
  }
  func.func @transform_0(%arg0: i32) -> (i32, i32) {
    %c0_i32 = arith.constant 0 : i32
    %c0_i32_0 = arith.constant 0 : i32
    return %c0_i32, %arg0 : i32, i32
  }
  func.func @transform_1(%arg0: i32) -> (i32, i32) {
    %c0_i32 = arith.constant 0 : i32
    %c0_i32_0 = arith.constant 0 : i32
    return %c0_i32, %arg0 : i32, i32
  }
  func.func @transform_2(%arg0: i32) -> (i32, i32, i32) {
    %c0_i32 = arith.constant 0 : i32
    %c0_i32_0 = arith.constant 0 : i32
    %c0_i32_1 = arith.constant 0 : i32
    %c0_i32_2 = arith.constant 0 : i32
    return %c0_i32, %c0_i32_0, %c0_i32_1 : i32, i32, i32
  }
  func.func @transform_3(%arg0: i32) -> (i32, i32, i32) {
    %c0_i32 = arith.constant 0 : i32
    %c0_i32_0 = arith.constant 0 : i32
    %c0_i32_1 = arith.constant 0 : i32
    %c0_i32_2 = arith.constant 0 : i32
    return %c0_i32, %c0_i32_0, %c0_i32_1 : i32, i32, i32
  }
  func.func @transform_4(%arg0: i32) -> (i32, i32, i32, i32) {
    %c0_i32 = arith.constant 0 : i32
    %c0_i32_0 = arith.constant 0 : i32
    %c0_i32_1 = arith.constant 0 : i32
    %c0_i32_2 = arith.constant 0 : i32
    return %c0_i32, %c0_i32_0, %c0_i32_1, %arg0 : i32, i32, i32, i32
  }
  func.func @transform_5(%arg0: i32) -> (i32, i32) {
    %c0_i32 = arith.constant 0 : i32
    %c0_i32_0 = arith.constant 0 : i32
    return %c0_i32, %arg0 : i32, i32
  }
}

</mosaic_0001>

<llo_original>
// kernel: tpu_custom_call.1
$region0: #{tpu_custom_call.1}
  #allocation0 [shape = 'u32[]', space=smem, size = 0x4, offset = 0x4, fixed_abs, tag = 'smem constant byte address 0x4 - core index']
  #allocation1 [shape = 'u32[144,128]{1,0:T(1,128)}', space=vmem, size = 0x12000, scoped, tag = 'internal scratch']
  %s0 = inlined_call_operand.hbm [shape: f32[8,128], index: 0, kind: input, shape index: {}]
  %s1 = inlined_call_operand.hbm [shape: f32[8,128], index: 1, kind: input, shape index: {}]
  %s2 = inlined_call_operand.hbm [shape: f32[2,4,8], index: 2, kind: input, shape index: {}]
  %s3 = inlined_call_operand.vmem [shape: f32[2,4,8], index: 3, kind: input, shape index: {}]
  %s4 = inlined_call_operand.hbm [shape: f32[16,4,8,128], index: 4, kind: input, shape index: {}]
  %s5 = inlined_call_operand.hbm [shape: f32[4,128], index: 5, kind: output, shape index: {}]
  %s6 = sld [smem:[#allocation0]]
  $region46: #{tpu_custom_call.1} parent=0
    _
  %s8 = ssub.s32 1, %s6
  %s9 = scalar_select 0, %s8, %s6
  $region1: #{tpu_custom_call.1} parent=0
    #allocation2 [shape = 'u8[4096]{0}', space=vmem, size = 0x1000, scoped, tag = 'input window, operand 0, single buffered']
    #allocation3 [shape = 's32[1]{0}', space=sflag, size = 0x4, scoped, tag = 'scoped memory for tpu_custom_call.1']
    #allocation4 [shape = 's32[1]{0}', space=sflag, size = 0x4, scoped, tag = 'scoped memory for tpu_custom_call.1']
    #allocation5 [shape = 'u8[4096]{0}', space=vmem, size = 0x1000, scoped, tag = 'input window, operand 1, single buffered']
    #allocation6 [shape = 's32[1]{0}', space=sflag, size = 0x4, scoped, tag = 'scoped memory for tpu_custom_call.1']
    #allocation7 [shape = 'u8[4096]{0}', space=vmem, size = 0x1000, scoped, tag = 'input window, operand 2, single buffered']
    #allocation8 [shape = 'u8[262144]{0}', space=vmem, size = 0x40000, scoped, tag = 'input window, operand 4, single buffered']
    #allocation9 [shape = 's32[1]{0}', space=sflag, size = 0x4, scoped, tag = 'scoped memory for tpu_custom_call.1']
    #allocation10 [shape = 'u8[2048]{0}', space=vmem, size = 0x800, scoped, tag = 'output window, operand 0, single buffered']
    %10 = vsyncpa [#allocation3], 0
    %11 = vsyncpa [#allocation6], 0
    %12 = vsyncpa [#allocation9], 0
    %13 = vsyncpa [#allocation4], 0
    // Predicated region
    $region2: #{tpu_custom_call.1} parent=1 // pred_check
      _
    $region3: #{tpu_custom_call.1} parent=1 // pred_check_branch
      %15 = sbr.rel (0) target = $region5
    $region4: #{tpu_custom_call.1} parent=1 // pred_region
      %s17 = ssub.s32 128, 128
      %18 = vsyncadd [#allocation3], %s17
      %s20 = sshll.u32 [#allocation2], 4
      %s21 = int_to_ptr.vmem [resolvable:$true] %s20
      %23 = dma.hbm_to_vmem [thread:$0]  %s0, 128, %s21, [#allocation3]
    $region5: #{tpu_custom_call.1} parent=1 // pred_fallthru
      _
    // Predicated region
    $region6: #{tpu_custom_call.1} parent=1 // pred_check
      _
    $region7: #{tpu_custom_call.1} parent=1 // pred_check_branch
      %25 = sbr.rel (0) target = $region9
    $region8: #{tpu_custom_call.1} parent=1 // pred_region
      %s27 = ssub.s32 128, 128
      %28 = vsyncadd [#allocation6], %s27
      %s30 = sshll.u32 [#allocation5], 4
      %s31 = int_to_ptr.vmem [resolvable:$true] %s30
      %33 = dma.hbm_to_vmem [thread:$0]  %s1, 128, %s31, [#allocation6]
    $region9: #{tpu_custom_call.1} parent=1 // pred_fallthru
      _
    // Predicated region
    $region10: #{tpu_custom_call.1} parent=1 // pred_check
      _
    $region11: #{tpu_custom_call.1} parent=1 // pred_check_branch
      %35 = sbr.rel (0) target = $region13
    $region12: #{tpu_custom_call.1} parent=1 // pred_region
      %s37 = ssub.s32 128, 128
      %38 = vsyncadd [#allocation6], %s37
      %s39 = sshll.u32 [#allocation7], 4
      %s40 = int_to_ptr.vmem [resolvable:$true] %s39
      %45 = dma.hbm_to_vmem [thread:$0]  %s2, 128, %s40, [#allocation6], 64, 64, 4
    $region13: #{tpu_custom_call.1} parent=1 // pred_fallthru
      _
    // Predicated region
    $region14: #{tpu_custom_call.1} parent=1 // pred_check
      _
    $region15: #{tpu_custom_call.1} parent=1 // pred_check_branch
      %47 = sbr.rel (0) target = $region17
    $region16: #{tpu_custom_call.1} parent=1 // pred_region
      _
    $region17: #{tpu_custom_call.1} parent=1 // pred_fallthru
      _
    // Predicated region
    $region18: #{tpu_custom_call.1} parent=1 // pred_check
      _
    $region19: #{tpu_custom_call.1} parent=1 // pred_check_branch
      %49 = sbr.rel (0) target = $region21
    $region20: #{tpu_custom_call.1} parent=1 // pred_region
      %s51 = ssub.s32 8192, 8192
      %52 = vsyncadd [#allocation9], %s51
      %s53 = sshll.u32 [#allocation8], 4
      %s54 = int_to_ptr.vmem [resolvable:$true] %s53
      %59 = dma.hbm_to_vmem [thread:$0]  %s4, 8192, %s54, [#allocation9], 128, 128, 8
    $region21: #{tpu_custom_call.1} parent=1 // pred_fallthru
      _
    // Predicated region
    $region22: #{tpu_custom_call.1} parent=1 // pred_check
      _
    $region23: #{tpu_custom_call.1} parent=1 // pred_check_branch
      %61 = sbr.rel (0) target = $region25
    $region24: #{tpu_custom_call.1} parent=1 // pred_region
      %62 = dma.done [#allocation3], 128
    $region25: #{tpu_custom_call.1} parent=1 // pred_fallthru
      _
    // Predicated region
    $region26: #{tpu_custom_call.1} parent=1 // pred_check
      _
    $region27: #{tpu_custom_call.1} parent=1 // pred_check_branch
      %64 = sbr.rel (0) target = $region29
    $region28: #{tpu_custom_call.1} parent=1 // pred_region
      %65 = dma.done [#allocation6], 128
    $region29: #{tpu_custom_call.1} parent=1 // pred_fallthru
      _
    // Predicated region
    $region30: #{tpu_custom_call.1} parent=1 // pred_check
      _
    $region31: #{tpu_custom_call.1} parent=1 // pred_check_branch
      %67 = sbr.rel (0) target = $region33
    $region32: #{tpu_custom_call.1} parent=1 // pred_region
      %68 = dma.done [#allocation6], 128
    $region33: #{tpu_custom_call.1} parent=1 // pred_fallthru
      _
    // Predicated region
    $region34: #{tpu_custom_call.1} parent=1 // pred_check
      _
    $region35: #{tpu_custom_call.1} parent=1 // pred_check_branch
      %70 = sbr.rel (0) target = $region37
    $region36: #{tpu_custom_call.1} parent=1 // pred_region
      %71 = dma.done [#allocation9], 8192
    $region37: #{tpu_custom_call.1} parent=1 // pred_fallthru
      _
    %v72 = vld [vmem:[#allocation2] sm:$0xff]
    %v73 = vld [vmem:[#allocation5] sm:$0xff]
    %v74 = vld [vmem:[#allocation7] sm:$0xf]
    %v75 = vld [vmem:[#allocation7 + $0x4] sm:$0xf]
    %v76 = vld [vmem:[%s3] sm:$0xf]
    %v77 = vld [vmem:[%s3 + $0x4] sm:$0xf]
    %v78 = vmul.f32 %v73, 1.442695
    %v79 = vpow.pop %v78
    %v80 = vmul.f32 %v76, 1.442695
    %v81 = vpow.pop %v80
    %v82 = vmul.f32 %v77, 1.442695
    %v83 = vpow.pop %v82
    %v84 = vadd.f32 %v81, 1.3719428
    %v85 = vadd.f32 %v83, 1.3719428
    %v86 = vrcp.pop %v84
    %v87 = vmul.f32 1.0, %v86
    %v88 = vrcp.pop %v85
    %v89 = vmul.f32 1.0, %v88
    %vm90 = vcmask 60416
    %v91 = vsel %vm90, %v87, 0.0
    %v92 = vsel %vm90, %v89, 0.0
    %v93 = vadd.f32 %v91, %v92
    %v94 = vrcp.pop %v93
    %v95 = vmul.f32 1.0, %v94
    %v96 = vmul.f32 %v74, %v87
    %v97 = vmul.f32 %v75, %v89
    %v98 = vsel %vm90, %v96, 0.0
    %v99 = vsel %vm90, %v97, 0.0
    %v100 = vadd.f32 %v98, %v99
    %v101 = vmul.f32 %v95, %v100
    %v102 = vadd.f32 %v95, 1.3719428
    %v103 = vrcp.pop %v102
    %v104 = vmul.f32 1.0, %v103
    %v105 = vlog2.pop %v102
    %v106 = vmul.f32 %v105, 0.6931472
    %v107 = vadd.f32 %v106, 1.837877
    %v108 = vsel %vm90, %v107, 0.0
    %109 = vadd.xlane.f32.xlu0 %v108
    %v110 = vpop.xlane.xlu0 %109
    %v111 = vmul.f32 %v110, -0.5
    %v112 = vrcp.pop %v79
    %v113 = vmul.f32 1.0, %v112
    %v114 = vlaneseq
    %v115 = vshrl.u32 %v114, 7
    %v116 = vsub.s32 0, %v115
    %v117 = vrot.slane %v102, %v116
    %119 = vbcast.lane.b32.xlu0 %v117, 256
    %v120 = vpop.permute.xlu0 %119
    %v121 = vlaneseq
    %v122 = vshrl.u32 %v121, 7
    %v123 = vsub.s32 1, %v122
    %v124 = vrot.slane %v102, %v123
    %126 = vbcast.lane.b32.xlu0 %v124, 256
    %v127 = vpop.permute.xlu0 %126
    %v128 = vlaneseq
    %v129 = vshrl.u32 %v128, 7
    %v130 = vsub.s32 2, %v129
    %v131 = vrot.slane %v102, %v130
    %133 = vbcast.lane.b32.xlu0 %v131, 256
    %v134 = vpop.permute.xlu0 %133
    %v135 = vlaneseq
    %v136 = vshrl.u32 %v135, 7
    %v137 = vsub.s32 3, %v136
    %v138 = vrot.slane %v102, %v137
    %140 = vbcast.lane.b32.xlu0 %v138, 256
    %v141 = vpop.permute.xlu0 %140
    %v142 = vlaneseq
    %v143 = vshrl.u32 %v142, 7
    %v144 = vsub.s32 0, %v143
    %v145 = vrot.slane %v101, %v144
    %147 = vbcast.lane.b32.xlu0 %v145, 256
    %v148 = vpop.permute.xlu0 %147
    %v149 = vlaneseq
    %v150 = vshrl.u32 %v149, 7
    %v151 = vsub.s32 1, %v150
    %v152 = vrot.slane %v101, %v151
    %154 = vbcast.lane.b32.xlu0 %v152, 256
    %v155 = vpop.permute.xlu0 %154
    %v156 = vlaneseq
    %v157 = vshrl.u32 %v156, 7
    %v158 = vsub.s32 2, %v157
    %v159 = vrot.slane %v101, %v158
    %161 = vbcast.lane.b32.xlu0 %v159, 256
    %v162 = vpop.permute.xlu0 %161
    %v163 = vlaneseq
    %v164 = vshrl.u32 %v163, 7
    %v165 = vsub.s32 3, %v164
    %v166 = vrot.slane %v101, %v165
    %168 = vbcast.lane.b32.xlu0 %v166, 256
    %v169 = vpop.permute.xlu0 %168
    %v170 = vlaneseq
    %v171 = vshrl.u32 %v170, 7
    %v172 = vsub.s32 0, %v171
    %v173 = vrot.slane %v104, %v172
    %175 = vbcast.lane.b32.xlu0 %v173, 256
    %v176 = vpop.permute.xlu0 %175
    %v177 = vlaneseq
    %v178 = vshrl.u32 %v177, 7
    %v179 = vsub.s32 1, %v178
    %v180 = vrot.slane %v104, %v179
    %182 = vbcast.lane.b32.xlu0 %v180, 256
    %v183 = vpop.permute.xlu0 %182
    %v184 = vlaneseq
    %v185 = vshrl.u32 %v184, 7
    %v186 = vsub.s32 2, %v185
    %v187 = vrot.slane %v104, %v186
    %189 = vbcast.lane.b32.xlu0 %v187, 256
    %v190 = vpop.permute.xlu0 %189
    %v191 = vlaneseq
    %v192 = vshrl.u32 %v191, 7
    %v193 = vsub.s32 3, %v192
    %v194 = vrot.slane %v104, %v193
    %196 = vbcast.lane.b32.xlu0 %v194, 256
    %v197 = vpop.permute.xlu0 %196
    %v198 = vadd.f32 %v113, %v176
    %v199 = vadd.f32 %v113, %v183
    %v200 = vadd.f32 %v113, %v190
    %v201 = vadd.f32 %v113, %v197
    %v202 = vrcp.pop %v198
    %v203 = vmul.f32 1.0, %v202
    %v204 = vrcp.pop %v199
    %v205 = vmul.f32 1.0, %v204
    %v206 = vrcp.pop %v200
    %v207 = vmul.f32 1.0, %v206
    %v208 = vrcp.pop %v201
    %v209 = vmul.f32 1.0, %v208
    %v210 = vmul.f32 %v72, %v113
    %v211 = vmul.f32 %v148, %v176
    %v212 = vmul.f32 %v155, %v183
    %v213 = vmul.f32 %v162, %v190
    %v214 = vmul.f32 %v169, %v197
    %v215 = vadd.f32 %v210, %v211
    %v216 = vadd.f32 %v210, %v212
    %v217 = vadd.f32 %v210, %v213
    %v218 = vadd.f32 %v210, %v214
    %v219 = vmul.f32 %v203, %v215
    %v220 = vmul.f32 %v205, %v216
    %v221 = vmul.f32 %v207, %v217
    %v222 = vmul.f32 %v209, %v218
    %v223 = vsub.f32 %v219, %v148
    %v224 = vsub.f32 %v220, %v155
    %v225 = vsub.f32 %v221, %v162
    %v226 = vsub.f32 %v222, %v169
    %v227 = vrsqrt.pop %v203
    %v228 = vmul.f32 %v203, %v227
    %vm229 = vcmp.eq.f32.partialorder %v203, inf
    %v230 = vsel %vm229, %v203, %v228
    %vm231 = vcmp.eq.f32.partialorder %v203, 0.0
    %v232 = vand.u32 %v203, 2147483648
    %v233 = vsel %vm231, %v232, %v230
    %v234 = vrsqrt.pop %v205
    %v235 = vmul.f32 %v205, %v234
    %vm236 = vcmp.eq.f32.partialorder %v205, inf
    %v237 = vsel %vm236, %v205, %v235
    %vm238 = vcmp.eq.f32.partialorder %v205, 0.0
    %v239 = vand.u32 %v205, 2147483648
    %v240 = vsel %vm238, %v239, %v237
    %v241 = vrsqrt.pop %v207
    %v242 = vmul.f32 %v207, %v241
    %vm243 = vcmp.eq.f32.partialorder %v207, inf
    %v244 = vsel %vm243, %v207, %v242
    %vm245 = vcmp.eq.f32.partialorder %v207, 0.0
    %v246 = vand.u32 %v207, 2147483648
    %v247 = vsel %vm245, %v246, %v244
    %v248 = vrsqrt.pop %v209
    %v249 = vmul.f32 %v209, %v248
    %vm250 = vcmp.eq.f32.partialorder %v209, inf
    %v251 = vsel %vm250, %v209, %v249
    %vm252 = vcmp.eq.f32.partialorder %v209, 0.0
    %v253 = vand.u32 %v209, 2147483648
    %v254 = vsel %vm252, %v253, %v251
    %v255 = vld [vmem:[#allocation8] sm:$0xff]
    %v256 = vld [vmem:[#allocation8 + $0x8] sm:$0xff]
    %v257 = vld [vmem:[#allocation8 + $0x10] sm:$0xff]
    %v258 = vld [vmem:[#allocation8 + $0x18] sm:$0xff]
    %v259 = vld [vmem:[#allocation8 + $0x20] sm:$0xff]
    %v260 = vld [vmem:[#allocation8 + $0x28] sm:$0xff]
    %v261 = vld [vmem:[#allocation8 + $0x30] sm:$0xff]
    %v262 = vld [vmem:[#allocation8 + $0x38] sm:$0xff]
    %v263 = vld [vmem:[#allocation8 + $0x40] sm:$0xff]
    %v264 = vld [vmem:[#allocation8 + $0x48] sm:$0xff]
    %v265 = vld [vmem:[#allocation8 + $0x50] sm:$0xff]
    %v266 = vld [vmem:[#allocation8 + $0x58] sm:$0xff]
    %v267 = vld [vmem:[#allocation8 + $0x60] sm:$0xff]
    %v268 = vld [vmem:[#allocation8 + $0x68] sm:$0xff]
    %v269 = vld [vmem:[#allocation8 + $0x70] sm:$0xff]
    %v270 = vld [vmem:[#allocation8 + $0x78] sm:$0xff]
    %v271 = vld [vmem:[#allocation8 + $0x80] sm:$0xff]
    %v272 = vld [vmem:[#allocation8 + $0x88] sm:$0xff]
    %v273 = vld [vmem:[#allocation8 + $0x90] sm:$0xff]
    %v274 = vld [vmem:[#allocation8 + $0x98] sm:$0xff]
    %v275 = vld [vmem:[#allocation8 + $0xa0] sm:$0xff]
    %v276 = vld [vmem:[#allocation8 + $0xa8] sm:$0xff]
    %v277 = vld [vmem:[#allocation8 + $0xb0] sm:$0xff]
    %v278 = vld [vmem:[#allocation8 + $0xb8] sm:$0xff]
    %v279 = vld [vmem:[#allocation8 + $0xc0] sm:$0xff]
    %v280 = vld [vmem:[#allocation8 + $0xc8] sm:$0xff]
    %v281 = vld [vmem:[#allocation8 + $0xd0] sm:$0xff]
    %v282 = vld [vmem:[#allocation8 + $0xd8] sm:$0xff]
    %v283 = vld [vmem:[#allocation8 + $0xe0] sm:$0xff]
    %v284 = vld [vmem:[#allocation8 + $0xe8] sm:$0xff]
    %v285 = vld [vmem:[#allocation8 + $0xf0] sm:$0xff]
    %v286 = vld [vmem:[#allocation8 + $0xf8] sm:$0xff]
    %v287 = vld [vmem:[#allocation8 + $0x100] sm:$0xff]
    %v288 = vld [vmem:[#allocation8 + $0x108] sm:$0xff]
    %v289 = vld [vmem:[#allocation8 + $0x110] sm:$0xff]
    %v290 = vld [vmem:[#allocation8 + $0x118] sm:$0xff]
    %v291 = vld [vmem:[#allocation8 + $0x120] sm:$0xff]
    %v292 = vld [vmem:[#allocation8 + $0x128] sm:$0xff]
    %v293 = vld [vmem:[#allocation8 + $0x130] sm:$0xff]
    %v294 = vld [vmem:[#allocation8 + $0x138] sm:$0xff]
    %v295 = vld [vmem:[#allocation8 + $0x140] sm:$0xff]
    %v296 = vld [vmem:[#allocation8 + $0x148] sm:$0xff]
    %v297 = vld [vmem:[#allocation8 + $0x150] sm:$0xff]
    %v298 = vld [vmem:[#allocation8 + $0x158] sm:$0xff]
    %v299 = vld [vmem:[#allocation8 + $0x160] sm:$0xff]
    %v300 = vld [vmem:[#allocation8 + $0x168] sm:$0xff]
    %v301 = vld [vmem:[#allocation8 + $0x170] sm:$0xff]
    %v302 = vld [vmem:[#allocation8 + $0x178] sm:$0xff]
    %v303 = vld [vmem:[#allocation8 + $0x180] sm:$0xff]
    %v304 = vld [vmem:[#allocation8 + $0x188] sm:$0xff]
    %v305 = vld [vmem:[#allocation8 + $0x190] sm:$0xff]
    %v306 = vld [vmem:[#allocation8 + $0x198] sm:$0xff]
    %v307 = vld [vmem:[#allocation8 + $0x1a0] sm:$0xff]
    %v308 = vld [vmem:[#allocation8 + $0x1a8] sm:$0xff]
    %v309 = vld [vmem:[#allocation8 + $0x1b0] sm:$0xff]
    %v310 = vld [vmem:[#allocation8 + $0x1b8] sm:$0xff]
    %v311 = vld [vmem:[#allocation8 + $0x1c0] sm:$0xff]
    %v312 = vld [vmem:[#allocation8 + $0x1c8] sm:$0xff]
    %v313 = vld [vmem:[#allocation8 + $0x1d0] sm:$0xff]
    %v314 = vld [vmem:[#allocation8 + $0x1d8] sm:$0xff]
    %v315 = vld [vmem:[#allocation8 + $0x1e0] sm:$0xff]
    %v316 = vld [vmem:[#allocation8 + $0x1e8] sm:$0xff]
    %v317 = vld [vmem:[#allocation8 + $0x1f0] sm:$0xff]
    %v318 = vld [vmem:[#allocation8 + $0x1f8] sm:$0xff]
    %v319 = vmul.f32 %v233, %v255
    %v320 = vmul.f32 %v240, %v256
    %v321 = vmul.f32 %v247, %v257
    %v322 = vmul.f32 %v254, %v258
    %v323 = vmul.f32 %v233, %v259
    %v324 = vmul.f32 %v240, %v260
    %v325 = vmul.f32 %v247, %v261
    %v326 = vmul.f32 %v254, %v262
    %v327 = vmul.f32 %v233, %v263
    %v328 = vmul.f32 %v240, %v264
    %v329 = vmul.f32 %v247, %v265
    %v330 = vmul.f32 %v254, %v266
    %v331 = vmul.f32 %v233, %v267
    %v332 = vmul.f32 %v240, %v268
    %v333 = vmul.f32 %v247, %v269
    %v334 = vmul.f32 %v254, %v270
    %v335 = vmul.f32 %v233, %v271
    %v336 = vmul.f32 %v240, %v272
    %v337 = vmul.f32 %v247, %v273
    %v338 = vmul.f32 %v254, %v274
    %v339 = vmul.f32 %v233, %v275
    %v340 = vmul.f32 %v240, %v276
    %v341 = vmul.f32 %v247, %v277
    %v342 = vmul.f32 %v254, %v278
    %v343 = vmul.f32 %v233, %v279
    %v344 = vmul.f32 %v240, %v280
    %v345 = vmul.f32 %v247, %v281
    %v346 = vmul.f32 %v254, %v282
    %v347 = vmul.f32 %v233, %v283
    %v348 = vmul.f32 %v240, %v284
    %v349 = vmul.f32 %v247, %v285
    %v350 = vmul.f32 %v254, %v286
    %v351 = vmul.f32 %v233, %v287
    %v352 = vmul.f32 %v240, %v288
    %v353 = vmul.f32 %v247, %v289
    %v354 = vmul.f32 %v254, %v290
    %v355 = vmul.f32 %v233, %v291
    %v356 = vmul.f32 %v240, %v292
    %v357 = vmul.f32 %v247, %v293
    %v358 = vmul.f32 %v254, %v294
    %v359 = vmul.f32 %v233, %v295
    %v360 = vmul.f32 %v240, %v296
    %v361 = vmul.f32 %v247, %v297
    %v362 = vmul.f32 %v254, %v298
    %v363 = vmul.f32 %v233, %v299
    %v364 = vmul.f32 %v240, %v300
    %v365 = vmul.f32 %v247, %v301
    %v366 = vmul.f32 %v254, %v302
    %v367 = vmul.f32 %v233, %v303
    %v368 = vmul.f32 %v240, %v304
    %v369 = vmul.f32 %v247, %v305
    %v370 = vmul.f32 %v254, %v306
    %v371 = vmul.f32 %v233, %v307
    %v372 = vmul.f32 %v240, %v308
    %v373 = vmul.f32 %v247, %v309
    %v374 = vmul.f32 %v254, %v310
    %v375 = vmul.f32 %v233, %v311
    %v376 = vmul.f32 %v240, %v312
    %v377 = vmul.f32 %v247, %v313
    %v378 = vmul.f32 %v254, %v314
    %v379 = vmul.f32 %v233, %v315
    %v380 = vmul.f32 %v240, %v316
    %v381 = vmul.f32 %v247, %v317
    %v382 = vmul.f32 %v254, %v318
    %v383 = vadd.f32 %v223, %v319
    %v384 = vadd.f32 %v224, %v320
    %v385 = vadd.f32 %v225, %v321
    %v386 = vadd.f32 %v226, %v322
    %v387 = vadd.f32 %v223, %v323
    %v388 = vadd.f32 %v224, %v324
    %v389 = vadd.f32 %v225, %v325
    %v390 = vadd.f32 %v226, %v326
    %v391 = vadd.f32 %v223, %v327
    %v392 = vadd.f32 %v224, %v328
    %v393 = vadd.f32 %v225, %v329
    %v394 = vadd.f32 %v226, %v330
    %v395 = vadd.f32 %v223, %v331
    %v396 = vadd.f32 %v224, %v332
    %v397 = vadd.f32 %v225, %v333
    %v398 = vadd.f32 %v226, %v334
    %v399 = vadd.f32 %v223, %v335
    %v400 = vadd.f32 %v224, %v336
    %v401 = vadd.f32 %v225, %v337
    %v402 = vadd.f32 %v226, %v338
    %v403 = vadd.f32 %v223, %v339
    %v404 = vadd.f32 %v224, %v340
    %v405 = vadd.f32 %v225, %v341
    %v406 = vadd.f32 %v226, %v342
    %v407 = vadd.f32 %v223, %v343
    %v408 = vadd.f32 %v224, %v344
    %v409 = vadd.f32 %v225, %v345
    %v410 = vadd.f32 %v226, %v346
    %v411 = vadd.f32 %v223, %v347
    %v412 = vadd.f32 %v224, %v348
    %v413 = vadd.f32 %v225, %v349
    %v414 = vadd.f32 %v226, %v350
    %v415 = vadd.f32 %v223, %v351
    %v416 = vadd.f32 %v224, %v352
    %v417 = vadd.f32 %v225, %v353
    %v418 = vadd.f32 %v226, %v354
    %v419 = vadd.f32 %v223, %v355
    %v420 = vadd.f32 %v224, %v356
    %v421 = vadd.f32 %v225, %v357
    %v422 = vadd.f32 %v226, %v358
    %v423 = vadd.f32 %v223, %v359
    %v424 = vadd.f32 %v224, %v360
    %v425 = vadd.f32 %v225, %v361
    %v426 = vadd.f32 %v226, %v362
    %v427 = vadd.f32 %v223, %v363
    %v428 = vadd.f32 %v224, %v364
    %v429 = vadd.f32 %v225, %v365
    %v430 = vadd.f32 %v226, %v366
    %v431 = vadd.f32 %v223, %v367
    %v432 = vadd.f32 %v224, %v368
    %v433 = vadd.f32 %v225, %v369
    %v434 = vadd.f32 %v226, %v370
    %v435 = vadd.f32 %v223, %v371
    %v436 = vadd.f32 %v224, %v372
    %v437 = vadd.f32 %v225, %v373
    %v438 = vadd.f32 %v226, %v374
    %v439 = vadd.f32 %v223, %v375
    %v440 = vadd.f32 %v224, %v376
    %v441 = vadd.f32 %v225, %v377
    %v442 = vadd.f32 %v226, %v378
    %v443 = vadd.f32 %v223, %v379
    %v444 = vadd.f32 %v224, %v380
    %v445 = vadd.f32 %v225, %v381
    %v446 = vadd.f32 %v226, %v382
    %v447 = vmul.f32 %v383, %v383
    %v448 = vmul.f32 %v384, %v384
    %v449 = vmul.f32 %v385, %v385
    %v450 = vmul.f32 %v386, %v386
    %v451 = vmul.f32 %v387, %v387
    %v452 = vmul.f32 %v388, %v388
    %v453 = vmul.f32 %v389, %v389
    %v454 = vmul.f32 %v390, %v390
    %v455 = vmul.f32 %v391, %v391
    %v456 = vmul.f32 %v392, %v392
    %v457 = vmul.f32 %v393, %v393
    %v458 = vmul.f32 %v394, %v394
    %v459 = vmul.f32 %v395, %v395
    %v460 = vmul.f32 %v396, %v396
    %v461 = vmul.f32 %v397, %v397
    %v462 = vmul.f32 %v398, %v398
    %v463 = vmul.f32 %v399, %v399
    %v464 = vmul.f32 %v400, %v400
    %v465 = vmul.f32 %v401, %v401
    %v466 = vmul.f32 %v402, %v402
    %v467 = vmul.f32 %v403, %v403
    %v468 = vmul.f32 %v404, %v404
    %v469 = vmul.f32 %v405, %v405
    %v470 = vmul.f32 %v406, %v406
    %v471 = vmul.f32 %v407, %v407
    %v472 = vmul.f32 %v408, %v408
    %v473 = vmul.f32 %v409, %v409
    %v474 = vmul.f32 %v410, %v410
    %v475 = vmul.f32 %v411, %v411
    %v476 = vmul.f32 %v412, %v412
    %v477 = vmul.f32 %v413, %v413
    %v478 = vmul.f32 %v414, %v414
    %v479 = vmul.f32 %v415, %v415
    %v480 = vmul.f32 %v416, %v416
    %v481 = vmul.f32 %v417, %v417
    %v482 = vmul.f32 %v418, %v418
    %v483 = vmul.f32 %v419, %v419
    %v484 = vmul.f32 %v420, %v420
    %v485 = vmul.f32 %v421, %v421
    %v486 = vmul.f32 %v422, %v422
    %v487 = vmul.f32 %v423, %v423
    %v488 = vmul.f32 %v424, %v424
    %v489 = vmul.f32 %v425, %v425
    %v490 = vmul.f32 %v426, %v426
    %v491 = vmul.f32 %v427, %v427
    %v492 = vmul.f32 %v428, %v428
    %v493 = vmul.f32 %v429, %v429
    %v494 = vmul.f32 %v430, %v430
    %v495 = vmul.f32 %v431, %v431
    %v496 = vmul.f32 %v432, %v432
    %v497 = vmul.f32 %v433, %v433
    %v498 = vmul.f32 %v434, %v434
    %v499 = vmul.f32 %v435, %v435
    %v500 = vmul.f32 %v436, %v436
    %v501 = vmul.f32 %v437, %v437
    %v502 = vmul.f32 %v438, %v438
    %v503 = vmul.f32 %v439, %v439
    %v504 = vmul.f32 %v440, %v440
    %v505 = vmul.f32 %v441, %v441
    %v506 = vmul.f32 %v442, %v442
    %v507 = vmul.f32 %v443, %v443
    %v508 = vmul.f32 %v444, %v444
    %v509 = vmul.f32 %v445, %v445
    %v510 = vmul.f32 %v446, %v446
    %v511 = vmul.f32 %v447, %v176
    %v512 = vmul.f32 %v448, %v183
    %v513 = vmul.f32 %v449, %v190
    %v514 = vmul.f32 %v450, %v197
    %v515 = vmul.f32 %v451, %v176
    %v516 = vmul.f32 %v452, %v183
    %v517 = vmul.f32 %v453, %v190
    %v518 = vmul.f32 %v454, %v197
    %v519 = vmul.f32 %v455, %v176
    %v520 = vmul.f32 %v456, %v183
    %v521 = vmul.f32 %v457, %v190
    %v522 = vmul.f32 %v458, %v197
    %v523 = vmul.f32 %v459, %v176
    %v524 = vmul.f32 %v460, %v183
    %v525 = vmul.f32 %v461, %v190
    %v526 = vmul.f32 %v462, %v197
    %v527 = vmul.f32 %v463, %v176
    %v528 = vmul.f32 %v464, %v183
    %v529 = vmul.f32 %v465, %v190
    %v530 = vmul.f32 %v466, %v197
    %v531 = vmul.f32 %v467, %v176
    %v532 = vmul.f32 %v468, %v183
    %v533 = vmul.f32 %v469, %v190
    %v534 = vmul.f32 %v470, %v197
    %v535 = vmul.f32 %v471, %v176
    %v536 = vmul.f32 %v472, %v183
    %v537 = vmul.f32 %v473, %v190
    %v538 = vmul.f32 %v474, %v197
    %v539 = vmul.f32 %v475, %v176
    %v540 = vmul.f32 %v476, %v183
    %v541 = vmul.f32 %v477, %v190
    %v542 = vmul.f32 %v478, %v197
    %v543 = vmul.f32 %v479, %v176
    %v544 = vmul.f32 %v480, %v183
    %v545 = vmul.f32 %v481, %v190
    %v546 = vmul.f32 %v482, %v197
    %v547 = vmul.f32 %v483, %v176
    %v548 = vmul.f32 %v484, %v183
    %v549 = vmul.f32 %v485, %v190
    %v550 = vmul.f32 %v486, %v197
    %v551 = vmul.f32 %v487, %v176
    %v552 = vmul.f32 %v488, %v183
    %v553 = vmul.f32 %v489, %v190
    %v554 = vmul.f32 %v490, %v197
    %v555 = vmul.f32 %v491, %v176
    %v556 = vmul.f32 %v492, %v183
    %v557 = vmul.f32 %v493, %v190
    %v558 = vmul.f32 %v494, %v197
    %v559 = vmul.f32 %v495, %v176
    %v560 = vmul.f32 %v496, %v183
    %v561 = vmul.f32 %v497, %v190
    %v562 = vmul.f32 %v498, %v197
    %v563 = vmul.f32 %v499, %v176
    %v564 = vmul.f32 %v500, %v183
    %v565 = vmul.f32 %v501, %v190
    %v566 = vmul.f32 %v502, %v197
    %v567 = vmul.f32 %v503, %v176
    %v568 = vmul.f32 %v504, %v183
    %v569 = vmul.f32 %v505, %v190
    %v570 = vmul.f32 %v506, %v197
    %v571 = vmul.f32 %v507, %v176
    %v572 = vmul.f32 %v508, %v183
    %v573 = vmul.f32 %v509, %v190
    %v574 = vmul.f32 %v510, %v197
    %v575 = vrot.slane %v511, 4
    %v576 = vadd.f32 %v511, %v575
    %v577 = vrot.slane %v576, 2
    %v578 = vadd.f32 %v576, %v577
    %v579 = vrot.slane %v578, 1
    %v580 = vadd.f32 %v578, %v579
    %v581 = vrot.slane %v512, 4
    %v582 = vadd.f32 %v512, %v581
    %v583 = vrot.slane %v582, 2
    %v584 = vadd.f32 %v582, %v583
    %v585 = vrot.slane %v584, 1
    %v586 = vadd.f32 %v584, %v585
    %v587 = vrot.slane %v513, 4
    %v588 = vadd.f32 %v513, %v587
    %v589 = vrot.slane %v588, 2
    %v590 = vadd.f32 %v588, %v589
    %v591 = vrot.slane %v590, 1
    %v592 = vadd.f32 %v590, %v591
    %v593 = vrot.slane %v514, 4
    %v594 = vadd.f32 %v514, %v593
    %v595 = vrot.slane %v594, 2
    %v596 = vadd.f32 %v594, %v595
    %v597 = vrot.slane %v596, 1
    %v598 = vadd.f32 %v596, %v597
    %v599 = vrot.slane %v515, 4
    %v600 = vadd.f32 %v515, %v599
    %v601 = vrot.slane %v600, 2
    %v602 = vadd.f32 %v600, %v601
    %v603 = vrot.slane %v602, 1
    %v604 = vadd.f32 %v602, %v603
    %v605 = vrot.slane %v516, 4
    %v606 = vadd.f32 %v516, %v605
    %v607 = vrot.slane %v606, 2
    %v608 = vadd.f32 %v606, %v607
    %v609 = vrot.slane %v608, 1
    %v610 = vadd.f32 %v608, %v609
    %v611 = vrot.slane %v517, 4
    %v612 = vadd.f32 %v517, %v611
    %v613 = vrot.slane %v612, 2
    %v614 = vadd.f32 %v612, %v613
    %v615 = vrot.slane %v614, 1
    %v616 = vadd.f32 %v614, %v615
    %v617 = vrot.slane %v518, 4
    %v618 = vadd.f32 %v518, %v617
    %v619 = vrot.slane %v618, 2
    %v620 = vadd.f32 %v618, %v619
    %v621 = vrot.slane %v620, 1
    %v622 = vadd.f32 %v620, %v621
    %v623 = vrot.slane %v519, 4
    %v624 = vadd.f32 %v519, %v623
    %v625 = vrot.slane %v624, 2
    %v626 = vadd.f32 %v624, %v625
    %v627 = vrot.slane %v626, 1
    %v628 = vadd.f32 %v626, %v627
    %v629 = vrot.slane %v520, 4
    %v630 = vadd.f32 %v520, %v629
    %v631 = vrot.slane %v630, 2
    %v632 = vadd.f32 %v630, %v631
    %v633 = vrot.slane %v632, 1
    %v634 = vadd.f32 %v632, %v633
    %v635 = vrot.slane %v521, 4
    %v636 = vadd.f32 %v521, %v635
    %v637 = vrot.slane %v636, 2
    %v638 = vadd.f32 %v636, %v637
    %v639 = vrot.slane %v638, 1
    %v640 = vadd.f32 %v638, %v639
    %v641 = vrot.slane %v522, 4
    %v642 = vadd.f32 %v522, %v641
    %v643 = vrot.slane %v642, 2
    %v644 = vadd.f32 %v642, %v643
    %v645 = vrot.slane %v644, 1
    %v646 = vadd.f32 %v644, %v645
    %v647 = vrot.slane %v523, 4
    %v648 = vadd.f32 %v523, %v647
    %v649 = vrot.slane %v648, 2
    %v650 = vadd.f32 %v648, %v649
    %v651 = vrot.slane %v650, 1
    %v652 = vadd.f32 %v650, %v651
    %v653 = vrot.slane %v524, 4
    %v654 = vadd.f32 %v524, %v653
    %v655 = vrot.slane %v654, 2
    %v656 = vadd.f32 %v654, %v655
    %v657 = vrot.slane %v656, 1
    %v658 = vadd.f32 %v656, %v657
    %v659 = vrot.slane %v525, 4
    %v660 = vadd.f32 %v525, %v659
    %v661 = vrot.slane %v660, 2
    %v662 = vadd.f32 %v660, %v661
    %v663 = vrot.slane %v662, 1
    %v664 = vadd.f32 %v662, %v663
    %v665 = vrot.slane %v526, 4
    %v666 = vadd.f32 %v526, %v665
    %v667 = vrot.slane %v666, 2
    %v668 = vadd.f32 %v666, %v667
    %v669 = vrot.slane %v668, 1
    %v670 = vadd.f32 %v668, %v669
    %v671 = vrot.slane %v527, 4
    %v672 = vadd.f32 %v527, %v671
    %v673 = vrot.slane %v672, 2
    %v674 = vadd.f32 %v672, %v673
    %v675 = vrot.slane %v674, 1
    %v676 = vadd.f32 %v674, %v675
    %v677 = vrot.slane %v528, 4
    %v678 = vadd.f32 %v528, %v677
    %v679 = vrot.slane %v678, 2
    %v680 = vadd.f32 %v678, %v679
    %v681 = vrot.slane %v680, 1
    %v682 = vadd.f32 %v680, %v681
    %v683 = vrot.slane %v529, 4
    %v684 = vadd.f32 %v529, %v683
    %v685 = vrot.slane %v684, 2
    %v686 = vadd.f32 %v684, %v685
    %v687 = vrot.slane %v686, 1
    %v688 = vadd.f32 %v686, %v687
    %v689 = vrot.slane %v530, 4
    %v690 = vadd.f32 %v530, %v689
    %v691 = vrot.slane %v690, 2
    %v692 = vadd.f32 %v690, %v691
    %v693 = vrot.slane %v692, 1
    %v694 = vadd.f32 %v692, %v693
    %v695 = vrot.slane %v531, 4
    %v696 = vadd.f32 %v531, %v695
    %v697 = vrot.slane %v696, 2
    %v698 = vadd.f32 %v696, %v697
    %v699 = vrot.slane %v698, 1
    %v700 = vadd.f32 %v698, %v699
    %v701 = vrot.slane %v532, 4
    %v702 = vadd.f32 %v532, %v701
    %v703 = vrot.slane %v702, 2
    %v704 = vadd.f32 %v702, %v703
    %v705 = vrot.slane %v704, 1
    %v706 = vadd.f32 %v704, %v705
    %v707 = vrot.slane %v533, 4
    %v708 = vadd.f32 %v533, %v707
    %v709 = vrot.slane %v708, 2
    %v710 = vadd.f32 %v708, %v709
    %v711 = vrot.slane %v710, 1
    %v712 = vadd.f32 %v710, %v711
    %v713 = vrot.slane %v534, 4
    %v714 = vadd.f32 %v534, %v713
    %v715 = vrot.slane %v714, 2
    %v716 = vadd.f32 %v714, %v715
    %v717 = vrot.slane %v716, 1
    %v718 = vadd.f32 %v716, %v717
    %v719 = vrot.slane %v535, 4
    %v720 = vadd.f32 %v535, %v719
    %v721 = vrot.slane %v720, 2
    %v722 = vadd.f32 %v720, %v721
    %v723 = vrot.slane %v722, 1
    %v724 = vadd.f32 %v722, %v723
    %v725 = vrot.slane %v536, 4
    %v726 = vadd.f32 %v536, %v725
    %v727 = vrot.slane %v726, 2
    %v728 = vadd.f32 %v726, %v727
    %v729 = vrot.slane %v728, 1
    %v730 = vadd.f32 %v728, %v729
    %v731 = vrot.slane %v537, 4
    %v732 = vadd.f32 %v537, %v731
    %v733 = vrot.slane %v732, 2
    %v734 = vadd.f32 %v732, %v733
    %v735 = vrot.slane %v734, 1
    %v736 = vadd.f32 %v734, %v735
    %v737 = vrot.slane %v538, 4
    %v738 = vadd.f32 %v538, %v737
    %v739 = vrot.slane %v738, 2
    %v740 = vadd.f32 %v738, %v739
    %v741 = vrot.slane %v740, 1
    %v742 = vadd.f32 %v740, %v741
    %v743 = vrot.slane %v539, 4
    %v744 = vadd.f32 %v539, %v743
    %v745 = vrot.slane %v744, 2
    %v746 = vadd.f32 %v744, %v745
    %v747 = vrot.slane %v746, 1
    %v748 = vadd.f32 %v746, %v747
    %v749 = vrot.slane %v540, 4
    %v750 = vadd.f32 %v540, %v749
    %v751 = vrot.slane %v750, 2
    %v752 = vadd.f32 %v750, %v751
    %v753 = vrot.slane %v752, 1
    %v754 = vadd.f32 %v752, %v753
    %v755 = vrot.slane %v541, 4
    %v756 = vadd.f32 %v541, %v755
    %v757 = vrot.slane %v756, 2
    %v758 = vadd.f32 %v756, %v757
    %v759 = vrot.slane %v758, 1
    %v760 = vadd.f32 %v758, %v759
    %v761 = vrot.slane %v542, 4
    %v762 = vadd.f32 %v542, %v761
    %v763 = vrot.slane %v762, 2
    %v764 = vadd.f32 %v762, %v763
    %v765 = vrot.slane %v764, 1
    %v766 = vadd.f32 %v764, %v765
    %v767 = vrot.slane %v543, 4
    %v768 = vadd.f32 %v543, %v767
    %v769 = vrot.slane %v768, 2
    %v770 = vadd.f32 %v768, %v769
    %v771 = vrot.slane %v770, 1
    %v772 = vadd.f32 %v770, %v771
    %v773 = vrot.slane %v544, 4
    %v774 = vadd.f32 %v544, %v773
    %v775 = vrot.slane %v774, 2
    %v776 = vadd.f32 %v774, %v775
    %v777 = vrot.slane %v776, 1
    %v778 = vadd.f32 %v776, %v777
    %v779 = vrot.slane %v545, 4
    %v780 = vadd.f32 %v545, %v779
    %v781 = vrot.slane %v780, 2
    %v782 = vadd.f32 %v780, %v781
    %v783 = vrot.slane %v782, 1
    %v784 = vadd.f32 %v782, %v783
    %v785 = vrot.slane %v546, 4
    %v786 = vadd.f32 %v546, %v785
    %v787 = vrot.slane %v786, 2
    %v788 = vadd.f32 %v786, %v787
    %v789 = vrot.slane %v788, 1
    %v790 = vadd.f32 %v788, %v789
    %v791 = vrot.slane %v547, 4
    %v792 = vadd.f32 %v547, %v791
    %v793 = vrot.slane %v792, 2
    %v794 = vadd.f32 %v792, %v793
    %v795 = vrot.slane %v794, 1
    %v796 = vadd.f32 %v794, %v795
    %v797 = vrot.slane %v548, 4
    %v798 = vadd.f32 %v548, %v797
    %v799 = vrot.slane %v798, 2
    %v800 = vadd.f32 %v798, %v799
    %v801 = vrot.slane %v800, 1
    %v802 = vadd.f32 %v800, %v801
    %v803 = vrot.slane %v549, 4
    %v804 = vadd.f32 %v549, %v803
    %v805 = vrot.slane %v804, 2
    %v806 = vadd.f32 %v804, %v805
    %v807 = vrot.slane %v806, 1
    %v808 = vadd.f32 %v806, %v807
    %v809 = vrot.slane %v550, 4
    %v810 = vadd.f32 %v550, %v809
    %v811 = vrot.slane %v810, 2
    %v812 = vadd.f32 %v810, %v811
    %v813 = vrot.slane %v812, 1
    %v814 = vadd.f32 %v812, %v813
    %v815 = vrot.slane %v551, 4
    %v816 = vadd.f32 %v551, %v815
    %v817 = vrot.slane %v816, 2
    %v818 = vadd.f32 %v816, %v817
    %v819 = vrot.slane %v818, 1
    %v820 = vadd.f32 %v818, %v819
    %v821 = vrot.slane %v552, 4
    %v822 = vadd.f32 %v552, %v821
    %v823 = vrot.slane %v822, 2
    %v824 = vadd.f32 %v822, %v823
    %v825 = vrot.slane %v824, 1
    %v826 = vadd.f32 %v824, %v825
    %v827 = vrot.slane %v553, 4
    %v828 = vadd.f32 %v553, %v827
    %v829 = vrot.slane %v828, 2
    %v830 = vadd.f32 %v828, %v829
    %v831 = vrot.slane %v830, 1
    %v832 = vadd.f32 %v830, %v831
    %v833 = vrot.slane %v554, 4
    %v834 = vadd.f32 %v554, %v833
    %v835 = vrot.slane %v834, 2
    %v836 = vadd.f32 %v834, %v835
    %v837 = vrot.slane %v836, 1
    %v838 = vadd.f32 %v836, %v837
    %v839 = vrot.slane %v555, 4
    %v840 = vadd.f32 %v555, %v839
    %v841 = vrot.slane %v840, 2
    %v842 = vadd.f32 %v840, %v841
    %v843 = vrot.slane %v842, 1
    %v844 = vadd.f32 %v842, %v843
    %v845 = vrot.slane %v556, 4
    %v846 = vadd.f32 %v556, %v845
    %v847 = vrot.slane %v846, 2
    %v848 = vadd.f32 %v846, %v847
    %v849 = vrot.slane %v848, 1
    %v850 = vadd.f32 %v848, %v849
    %v851 = vrot.slane %v557, 4
    %v852 = vadd.f32 %v557, %v851
    %v853 = vrot.slane %v852, 2
    %v854 = vadd.f32 %v852, %v853
    %v855 = vrot.slane %v854, 1
    %v856 = vadd.f32 %v854, %v855
    %v857 = vrot.slane %v558, 4
    %v858 = vadd.f32 %v558, %v857
    %v859 = vrot.slane %v858, 2
    %v860 = vadd.f32 %v858, %v859
    %v861 = vrot.slane %v860, 1
    %v862 = vadd.f32 %v860, %v861
    %v863 = vrot.slane %v559, 4
    %v864 = vadd.f32 %v559, %v863
    %v865 = vrot.slane %v864, 2
    %v866 = vadd.f32 %v864, %v865
    %v867 = vrot.slane %v866, 1
    %v868 = vadd.f32 %v866, %v867
    %v869 = vrot.slane %v560, 4
    %v870 = vadd.f32 %v560, %v869
    %v871 = vrot.slane %v870, 2
    %v872 = vadd.f32 %v870, %v871
    %v873 = vrot.slane %v872, 1
    %v874 = vadd.f32 %v872, %v873
    %v875 = vrot.slane %v561, 4
    %v876 = vadd.f32 %v561, %v875
    %v877 = vrot.slane %v876, 2
    %v878 = vadd.f32 %v876, %v877
    %v879 = vrot.slane %v878, 1
    %v880 = vadd.f32 %v878, %v879
    %v881 = vrot.slane %v562, 4
    %v882 = vadd.f32 %v562, %v881
    %v883 = vrot.slane %v882, 2
    %v884 = vadd.f32 %v882, %v883
    %v885 = vrot.slane %v884, 1
    %v886 = vadd.f32 %v884, %v885
    %v887 = vrot.slane %v563, 4
    %v888 = vadd.f32 %v563, %v887
    %v889 = vrot.slane %v888, 2
    %v890 = vadd.f32 %v888, %v889
    %v891 = vrot.slane %v890, 1
    %v892 = vadd.f32 %v890, %v891
    %v893 = vrot.slane %v564, 4
    %v894 = vadd.f32 %v564, %v893
    %v895 = vrot.slane %v894, 2
    %v896 = vadd.f32 %v894, %v895
    %v897 = vrot.slane %v896, 1
    %v898 = vadd.f32 %v896, %v897
    %v899 = vrot.slane %v565, 4
    %v900 = vadd.f32 %v565, %v899
    %v901 = vrot.slane %v900, 2
    %v902 = vadd.f32 %v900, %v901
    %v903 = vrot.slane %v902, 1
    %v904 = vadd.f32 %v902, %v903
    %v905 = vrot.slane %v566, 4
    %v906 = vadd.f32 %v566, %v905
    %v907 = vrot.slane %v906, 2
    %v908 = vadd.f32 %v906, %v907
    %v909 = vrot.slane %v908, 1
    %v910 = vadd.f32 %v908, %v909
    %v911 = vrot.slane %v567, 4
    %v912 = vadd.f32 %v567, %v911
    %v913 = vrot.slane %v912, 2
    %v914 = vadd.f32 %v912, %v913
    %v915 = vrot.slane %v914, 1
    %v916 = vadd.f32 %v914, %v915
    %v917 = vrot.slane %v568, 4
    %v918 = vadd.f32 %v568, %v917
    %v919 = vrot.slane %v918, 2
    %v920 = vadd.f32 %v918, %v919
    %v921 = vrot.slane %v920, 1
    %v922 = vadd.f32 %v920, %v921
    %v923 = vrot.slane %v569, 4
    %v924 = vadd.f32 %v569, %v923
    %v925 = vrot.slane %v924, 2
    %v926 = vadd.f32 %v924, %v925
    %v927 = vrot.slane %v926, 1
    %v928 = vadd.f32 %v926, %v927
    %v929 = vrot.slane %v570, 4
    %v930 = vadd.f32 %v570, %v929
    %v931 = vrot.slane %v930, 2
    %v932 = vadd.f32 %v930, %v931
    %v933 = vrot.slane %v932, 1
    %v934 = vadd.f32 %v932, %v933
    %v935 = vrot.slane %v571, 4
    %v936 = vadd.f32 %v571, %v935
    %v937 = vrot.slane %v936, 2
    %v938 = vadd.f32 %v936, %v937
    %v939 = vrot.slane %v938, 1
    %v940 = vadd.f32 %v938, %v939
    %v941 = vrot.slane %v572, 4
    %v942 = vadd.f32 %v572, %v941
    %v943 = vrot.slane %v942, 2
    %v944 = vadd.f32 %v942, %v943
    %v945 = vrot.slane %v944, 1
    %v946 = vadd.f32 %v944, %v945
    %v947 = vrot.slane %v573, 4
    %v948 = vadd.f32 %v573, %v947
    %v949 = vrot.slane %v948, 2
    %v950 = vadd.f32 %v948, %v949
    %v951 = vrot.slane %v950, 1
    %v952 = vadd.f32 %v950, %v951
    %v953 = vrot.slane %v574, 4
    %v954 = vadd.f32 %v574, %v953
    %v955 = vrot.slane %v954, 2
    %v956 = vadd.f32 %v954, %v955
    %v957 = vrot.slane %v956, 1
    %v958 = vadd.f32 %v956, %v957
    %v959 = vmul.f32 %v580, 0.5
    %v960 = vmul.f32 %v586, 0.5
    %v961 = vmul.f32 %v592, 0.5
    %v962 = vmul.f32 %v598, 0.5
    %v963 = vmul.f32 %v604, 0.5
    %v964 = vmul.f32 %v610, 0.5
    %v965 = vmul.f32 %v616, 0.5
    %v966 = vmul.f32 %v622, 0.5
    %v967 = vmul.f32 %v628, 0.5
    %v968 = vmul.f32 %v634, 0.5
    %v969 = vmul.f32 %v640, 0.5
    %v970 = vmul.f32 %v646, 0.5
    %v971 = vmul.f32 %v652, 0.5
    %v972 = vmul.f32 %v658, 0.5
    %v973 = vmul.f32 %v664, 0.5
    %v974 = vmul.f32 %v670, 0.5
    %v975 = vmul.f32 %v676, 0.5
    %v976 = vmul.f32 %v682, 0.5
    %v977 = vmul.f32 %v688, 0.5
    %v978 = vmul.f32 %v694, 0.5
    %v979 = vmul.f32 %v700, 0.5
    %v980 = vmul.f32 %v706, 0.5
    %v981 = vmul.f32 %v712, 0.5
    %v982 = vmul.f32 %v718, 0.5
    %v983 = vmul.f32 %v724, 0.5
    %v984 = vmul.f32 %v730, 0.5
    %v985 = vmul.f32 %v736, 0.5
    %v986 = vmul.f32 %v742, 0.5
    %v987 = vmul.f32 %v748, 0.5
    %v988 = vmul.f32 %v754, 0.5
    %v989 = vmul.f32 %v760, 0.5
    %v990 = vmul.f32 %v766, 0.5
    %v991 = vmul.f32 %v772, 0.5
    %v992 = vmul.f32 %v778, 0.5
    %v993 = vmul.f32 %v784, 0.5
    %v994 = vmul.f32 %v790, 0.5
    %v995 = vmul.f32 %v796, 0.5
    %v996 = vmul.f32 %v802, 0.5
    %v997 = vmul.f32 %v808, 0.5
    %v998 = vmul.f32 %v814, 0.5
    %v999 = vmul.f32 %v820, 0.5
    %v1000 = vmul.f32 %v826, 0.5
    %v1001 = vmul.f32 %v832, 0.5
    %v1002 = vmul.f32 %v838, 0.5
    %v1003 = vmul.f32 %v844, 0.5
    %v1004 = vmul.f32 %v850, 0.5
    %v1005 = vmul.f32 %v856, 0.5
    %v1006 = vmul.f32 %v862, 0.5
    %v1007 = vmul.f32 %v868, 0.5
    %v1008 = vmul.f32 %v874, 0.5
    %v1009 = vmul.f32 %v880, 0.5
    %v1010 = vmul.f32 %v886, 0.5
    %v1011 = vmul.f32 %v892, 0.5
    %v1012 = vmul.f32 %v898, 0.5
    %v1013 = vmul.f32 %v904, 0.5
    %v1014 = vmul.f32 %v910, 0.5
    %v1015 = vmul.f32 %v916, 0.5
    %v1016 = vmul.f32 %v922, 0.5
    %v1017 = vmul.f32 %v928, 0.5
    %v1018 = vmul.f32 %v934, 0.5
    %v1019 = vmul.f32 %v940, 0.5
    %v1020 = vmul.f32 %v946, 0.5
    %v1021 = vmul.f32 %v952, 0.5
    %v1022 = vmul.f32 %v958, 0.5
    %vm1087 = vcmask 1041409
    %v1088 = vsel %vm1087, %v960, %v959
    %vm1089 = vcmask 1042434
    %v1090 = vsel %vm1089, %v961, %v1088
    %vm1091 = vcmask 1043459
    %v1092 = vsel %vm1091, %v962, %v1090
    %v1093 = vsel %vm1087, %v964, %v963
    %v1094 = vsel %vm1089, %v965, %v1093
    %v1095 = vsel %vm1091, %v966, %v1094
    %v1096 = vsel %vm1087, %v968, %v967
    %v1097 = vsel %vm1089, %v969, %v1096
    %v1098 = vsel %vm1091, %v970, %v1097
    %v1099 = vsel %vm1087, %v972, %v971
    %v1100 = vsel %vm1089, %v973, %v1099
    %v1101 = vsel %vm1091, %v974, %v1100
    %v1102 = vsel %vm1087, %v976, %v975
    %v1103 = vsel %vm1089, %v977, %v1102
    %v1104 = vsel %vm1091, %v978, %v1103
    %v1105 = vsel %vm1087, %v980, %v979
    %v1106 = vsel %vm1089, %v981, %v1105
    %v1107 = vsel %vm1091, %v982, %v1106
    %v1108 = vsel %vm1087, %v984, %v983
    %v1109 = vsel %vm1089, %v985, %v1108
    %v1110 = vsel %vm1091, %v986, %v1109
    %v1111 = vsel %vm1087, %v988, %v987
    %v1112 = vsel %vm1089, %v989, %v1111
    %v1113 = vsel %vm1091, %v990, %v1112
    %v1114 = vsel %vm1087, %v992, %v991
    %v1115 = vsel %vm1089, %v993, %v1114
    %v1116 = vsel %vm1091, %v994, %v1115
    %v1117 = vsel %vm1087, %v996, %v995
    %v1118 = vsel %vm1089, %v997, %v1117
    %v1119 = vsel %vm1091, %v998, %v1118
    %v1120 = vsel %vm1087, %v1000, %v999
    %v1121 = vsel %vm1089, %v1001, %v1120
    %v1122 = vsel %vm1091, %v1002, %v1121
    %v1123 = vsel %vm1087, %v1004, %v1003
    %v1124 = vsel %vm1089, %v1005, %v1123
    %v1125 = vsel %vm1091, %v1006, %v1124
    %v1126 = vsel %vm1087, %v1008, %v1007
    %v1127 = vsel %vm1089, %v1009, %v1126
    %v1128 = vsel %vm1091, %v1010, %v1127
    %v1129 = vsel %vm1087, %v1012, %v1011
    %v1130 = vsel %vm1089, %v1013, %v1129
    %v1131 = vsel %vm1091, %v1014, %v1130
    %v1132 = vsel %vm1087, %v1016, %v1015
    %v1133 = vsel %vm1089, %v1017, %v1132
    %v1134 = vsel %vm1091, %v1018, %v1133
    %v1135 = vsel %vm1087, %v1020, %v1019
    %v1136 = vsel %vm1089, %v1021, %v1135
    %v1137 = vsel %vm1091, %v1022, %v1136
    %v1154 = vsub.f32 %v111, %v1092
    %v1155 = vsub.f32 %v111, %v1095
    %v1156 = vsub.f32 %v111, %v1098
    %v1157 = vsub.f32 %v111, %v1101
    %v1158 = vsub.f32 %v111, %v1104
    %v1159 = vsub.f32 %v111, %v1107
    %v1160 = vsub.f32 %v111, %v1110
    %v1161 = vsub.f32 %v111, %v1113
    %v1162 = vsub.f32 %v111, %v1116
    %v1163 = vsub.f32 %v111, %v1119
    %v1164 = vsub.f32 %v111, %v1122
    %v1165 = vsub.f32 %v111, %v1125
    %v1166 = vsub.f32 %v111, %v1128
    %v1167 = vsub.f32 %v111, %v1131
    %v1168 = vsub.f32 %v111, %v1134
    %v1169 = vsub.f32 %v111, %v1137
    %vm1170 = vcmask 1043456
    %v1171 = vsel %vm1170, %v1154, -inf
    %v1172 = vrot.slane %v1171, 4
    %v1173 = vmax.f32 %v1171, %v1172
    %v1174 = vrot.slane %v1173, 2
    %v1175 = vmax.f32 %v1173, %v1174
    %v1176 = vrot.slane %v1175, 1
    %v1177 = vmax.f32 %v1175, %v1176
    %v1178 = vsel %vm1170, %v1155, -inf
    %v1179 = vrot.slane %v1178, 4
    %v1180 = vmax.f32 %v1178, %v1179
    %v1181 = vrot.slane %v1180, 2
    %v1182 = vmax.f32 %v1180, %v1181
    %v1183 = vrot.slane %v1182, 1
    %v1184 = vmax.f32 %v1182, %v1183
    %v1185 = vsel %vm1170, %v1156, -inf
    %v1186 = vrot.slane %v1185, 4
    %v1187 = vmax.f32 %v1185, %v1186
    %v1188 = vrot.slane %v1187, 2
    %v1189 = vmax.f32 %v1187, %v1188
    %v1190 = vrot.slane %v1189, 1
    %v1191 = vmax.f32 %v1189, %v1190
    %v1192 = vsel %vm1170, %v1157, -inf
    %v1193 = vrot.slane %v1192, 4
    %v1194 = vmax.f32 %v1192, %v1193
    %v1195 = vrot.slane %v1194, 2
    %v1196 = vmax.f32 %v1194, %v1195
    %v1197 = vrot.slane %v1196, 1
    %v1198 = vmax.f32 %v1196, %v1197
    %v1199 = vsel %vm1170, %v1158, -inf
    %v1200 = vrot.slane %v1199, 4
    %v1201 = vmax.f32 %v1199, %v1200
    %v1202 = vrot.slane %v1201, 2
    %v1203 = vmax.f32 %v1201, %v1202
    %v1204 = vrot.slane %v1203, 1
    %v1205 = vmax.f32 %v1203, %v1204
    %v1206 = vsel %vm1170, %v1159, -inf
    %v1207 = vrot.slane %v1206, 4
    %v1208 = vmax.f32 %v1206, %v1207
    %v1209 = vrot.slane %v1208, 2
    %v1210 = vmax.f32 %v1208, %v1209
    %v1211 = vrot.slane %v1210, 1
    %v1212 = vmax.f32 %v1210, %v1211
    %v1213 = vsel %vm1170, %v1160, -inf
    %v1214 = vrot.slane %v1213, 4
    %v1215 = vmax.f32 %v1213, %v1214
    %v1216 = vrot.slane %v1215, 2
    %v1217 = vmax.f32 %v1215, %v1216
    %v1218 = vrot.slane %v1217, 1
    %v1219 = vmax.f32 %v1217, %v1218
    %v1220 = vsel %vm1170, %v1161, -inf
    %v1221 = vrot.slane %v1220, 4
    %v1222 = vmax.f32 %v1220, %v1221
    %v1223 = vrot.slane %v1222, 2
    %v1224 = vmax.f32 %v1222, %v1223
    %v1225 = vrot.slane %v1224, 1
    %v1226 = vmax.f32 %v1224, %v1225
    %v1227 = vsel %vm1170, %v1162, -inf
    %v1228 = vrot.slane %v1227, 4
    %v1229 = vmax.f32 %v1227, %v1228
    %v1230 = vrot.slane %v1229, 2
    %v1231 = vmax.f32 %v1229, %v1230
    %v1232 = vrot.slane %v1231, 1
    %v1233 = vmax.f32 %v1231, %v1232
    %v1234 = vsel %vm1170, %v1163, -inf
    %v1235 = vrot.slane %v1234, 4
    %v1236 = vmax.f32 %v1234, %v1235
    %v1237 = vrot.slane %v1236, 2
    %v1238 = vmax.f32 %v1236, %v1237
    %v1239 = vrot.slane %v1238, 1
    %v1240 = vmax.f32 %v1238, %v1239
    %v1241 = vsel %vm1170, %v1164, -inf
    %v1242 = vrot.slane %v1241, 4
    %v1243 = vmax.f32 %v1241, %v1242
    %v1244 = vrot.slane %v1243, 2
    %v1245 = vmax.f32 %v1243, %v1244
    %v1246 = vrot.slane %v1245, 1
    %v1247 = vmax.f32 %v1245, %v1246
    %v1248 = vsel %vm1170, %v1165, -inf
    %v1249 = vrot.slane %v1248, 4
    %v1250 = vmax.f32 %v1248, %v1249
    %v1251 = vrot.slane %v1250, 2
    %v1252 = vmax.f32 %v1250, %v1251
    %v1253 = vrot.slane %v1252, 1
    %v1254 = vmax.f32 %v1252, %v1253
    %v1255 = vsel %vm1170, %v1166, -inf
    %v1256 = vrot.slane %v1255, 4
    %v1257 = vmax.f32 %v1255, %v1256
    %v1258 = vrot.slane %v1257, 2
    %v1259 = vmax.f32 %v1257, %v1258
    %v1260 = vrot.slane %v1259, 1
    %v1261 = vmax.f32 %v1259, %v1260
    %v1262 = vsel %vm1170, %v1167, -inf
    %v1263 = vrot.slane %v1262, 4
    %v1264 = vmax.f32 %v1262, %v1263
    %v1265 = vrot.slane %v1264, 2
    %v1266 = vmax.f32 %v1264, %v1265
    %v1267 = vrot.slane %v1266, 1
    %v1268 = vmax.f32 %v1266, %v1267
    %v1269 = vsel %vm1170, %v1168, -inf
    %v1270 = vrot.slane %v1269, 4
    %v1271 = vmax.f32 %v1269, %v1270
    %v1272 = vrot.slane %v1271, 2
    %v1273 = vmax.f32 %v1271, %v1272
    %v1274 = vrot.slane %v1273, 1
    %v1275 = vmax.f32 %v1273, %v1274
    %v1276 = vsel %vm1170, %v1169, -inf
    %v1277 = vrot.slane %v1276, 4
    %v1278 = vmax.f32 %v1276, %v1277
    %v1279 = vrot.slane %v1278, 2
    %v1280 = vmax.f32 %v1278, %v1279
    %v1281 = vrot.slane %v1280, 1
    %v1282 = vmax.f32 %v1280, %v1281
    %v1283 = vsub.f32 %v1154, %v1177
    %v1284 = vsub.f32 %v1155, %v1184
    %v1285 = vsub.f32 %v1156, %v1191
    %v1286 = vsub.f32 %v1157, %v1198
    %v1287 = vsub.f32 %v1158, %v1205
    %v1288 = vsub.f32 %v1159, %v1212
    %v1289 = vsub.f32 %v1160, %v1219
    %v1290 = vsub.f32 %v1161, %v1226
    %v1291 = vsub.f32 %v1162, %v1233
    %v1292 = vsub.f32 %v1163, %v1240
    %v1293 = vsub.f32 %v1164, %v1247
    %v1294 = vsub.f32 %v1165, %v1254
    %v1295 = vsub.f32 %v1166, %v1261
    %v1296 = vsub.f32 %v1167, %v1268
    %v1297 = vsub.f32 %v1168, %v1275
    %v1298 = vsub.f32 %v1169, %v1282
    %v1299 = vmul.f32 %v1283, 1.442695
    %v1300 = vpow.pop %v1299
    %v1301 = vmul.f32 %v1284, 1.442695
    %v1302 = vpow.pop %v1301
    %v1303 = vmul.f32 %v1285, 1.442695
    %v1304 = vpow.pop %v1303
    %v1305 = vmul.f32 %v1286, 1.442695
    %v1306 = vpow.pop %v1305
    %v1307 = vmul.f32 %v1287, 1.442695
    %v1308 = vpow.pop %v1307
    %v1309 = vmul.f32 %v1288, 1.442695
    %v1310 = vpow.pop %v1309
    %v1311 = vmul.f32 %v1289, 1.442695
    %v1312 = vpow.pop %v1311
    %v1313 = vmul.f32 %v1290, 1.442695
    %v1314 = vpow.pop %v1313
    %v1315 = vmul.f32 %v1291, 1.442695
    %v1316 = vpow.pop %v1315
    %v1317 = vmul.f32 %v1292, 1.442695
    %v1318 = vpow.pop %v1317
    %v1319 = vmul.f32 %v1293, 1.442695
    %v1320 = vpow.pop %v1319
    %v1321 = vmul.f32 %v1294, 1.442695
    %v1322 = vpow.pop %v1321
    %v1323 = vmul.f32 %v1295, 1.442695
    %v1324 = vpow.pop %v1323
    %v1325 = vmul.f32 %v1296, 1.442695
    %v1326 = vpow.pop %v1325
    %v1327 = vmul.f32 %v1297, 1.442695
    %v1328 = vpow.pop %v1327
    %v1329 = vmul.f32 %v1298, 1.442695
    %v1330 = vpow.pop %v1329
    %v1331 = vsel %vm1170, %v1300, 0.0
    %v1332 = vrot.slane %v1331, 4
    %v1333 = vadd.f32 %v1331, %v1332
    %v1334 = vrot.slane %v1333, 2
    %v1335 = vadd.f32 %v1333, %v1334
    %v1336 = vrot.slane %v1335, 1
    %v1337 = vadd.f32 %v1335, %v1336
    %v1338 = vsel %vm1170, %v1302, 0.0
    %v1339 = vrot.slane %v1338, 4
    %v1340 = vadd.f32 %v1338, %v1339
    %v1341 = vrot.slane %v1340, 2
    %v1342 = vadd.f32 %v1340, %v1341
    %v1343 = vrot.slane %v1342, 1
    %v1344 = vadd.f32 %v1342, %v1343
    %v1345 = vsel %vm1170, %v1304, 0.0
    %v1346 = vrot.slane %v1345, 4
    %v1347 = vadd.f32 %v1345, %v1346
    %v1348 = vrot.slane %v1347, 2
    %v1349 = vadd.f32 %v1347, %v1348
    %v1350 = vrot.slane %v1349, 1
    %v1351 = vadd.f32 %v1349, %v1350
    %v1352 = vsel %vm1170, %v1306, 0.0
    %v1353 = vrot.slane %v1352, 4
    %v1354 = vadd.f32 %v1352, %v1353
    %v1355 = vrot.slane %v1354, 2
    %v1356 = vadd.f32 %v1354, %v1355
    %v1357 = vrot.slane %v1356, 1
    %v1358 = vadd.f32 %v1356, %v1357
    %v1359 = vsel %vm1170, %v1308, 0.0
    %v1360 = vrot.slane %v1359, 4
    %v1361 = vadd.f32 %v1359, %v1360
    %v1362 = vrot.slane %v1361, 2
    %v1363 = vadd.f32 %v1361, %v1362
    %v1364 = vrot.slane %v1363, 1
    %v1365 = vadd.f32 %v1363, %v1364
    %v1366 = vsel %vm1170, %v1310, 0.0
    %v1367 = vrot.slane %v1366, 4
    %v1368 = vadd.f32 %v1366, %v1367
    %v1369 = vrot.slane %v1368, 2
    %v1370 = vadd.f32 %v1368, %v1369
    %v1371 = vrot.slane %v1370, 1
    %v1372 = vadd.f32 %v1370, %v1371
    %v1373 = vsel %vm1170, %v1312, 0.0
    %v1374 = vrot.slane %v1373, 4
    %v1375 = vadd.f32 %v1373, %v1374
    %v1376 = vrot.slane %v1375, 2
    %v1377 = vadd.f32 %v1375, %v1376
    %v1378 = vrot.slane %v1377, 1
    %v1379 = vadd.f32 %v1377, %v1378
    %v1380 = vsel %vm1170, %v1314, 0.0
    %v1381 = vrot.slane %v1380, 4
    %v1382 = vadd.f32 %v1380, %v1381
    %v1383 = vrot.slane %v1382, 2
    %v1384 = vadd.f32 %v1382, %v1383
    %v1385 = vrot.slane %v1384, 1
    %v1386 = vadd.f32 %v1384, %v1385
    %v1387 = vsel %vm1170, %v1316, 0.0
    %v1388 = vrot.slane %v1387, 4
    %v1389 = vadd.f32 %v1387, %v1388
    %v1390 = vrot.slane %v1389, 2
    %v1391 = vadd.f32 %v1389, %v1390
    %v1392 = vrot.slane %v1391, 1
    %v1393 = vadd.f32 %v1391, %v1392
    %v1394 = vsel %vm1170, %v1318, 0.0
    %v1395 = vrot.slane %v1394, 4
    %v1396 = vadd.f32 %v1394, %v1395
    %v1397 = vrot.slane %v1396, 2
    %v1398 = vadd.f32 %v1396, %v1397
    %v1399 = vrot.slane %v1398, 1
    %v1400 = vadd.f32 %v1398, %v1399
    %v1401 = vsel %vm1170, %v1320, 0.0
    %v1402 = vrot.slane %v1401, 4
    %v1403 = vadd.f32 %v1401, %v1402
    %v1404 = vrot.slane %v1403, 2
    %v1405 = vadd.f32 %v1403, %v1404
    %v1406 = vrot.slane %v1405, 1
    %v1407 = vadd.f32 %v1405, %v1406
    %v1408 = vsel %vm1170, %v1322, 0.0
    %v1409 = vrot.slane %v1408, 4
    %v1410 = vadd.f32 %v1408, %v1409
    %v1411 = vrot.slane %v1410, 2
    %v1412 = vadd.f32 %v1410, %v1411
    %v1413 = vrot.slane %v1412, 1
    %v1414 = vadd.f32 %v1412, %v1413
    %v1415 = vsel %vm1170, %v1324, 0.0
    %v1416 = vrot.slane %v1415, 4
    %v1417 = vadd.f32 %v1415, %v1416
    %v1418 = vrot.slane %v1417, 2
    %v1419 = vadd.f32 %v1417, %v1418
    %v1420 = vrot.slane %v1419, 1
    %v1421 = vadd.f32 %v1419, %v1420
    %v1422 = vsel %vm1170, %v1326, 0.0
    %v1423 = vrot.slane %v1422, 4
    %v1424 = vadd.f32 %v1422, %v1423
    %v1425 = vrot.slane %v1424, 2
    %v1426 = vadd.f32 %v1424, %v1425
    %v1427 = vrot.slane %v1426, 1
    %v1428 = vadd.f32 %v1426, %v1427
    %v1429 = vsel %vm1170, %v1328, 0.0
    %v1430 = vrot.slane %v1429, 4
    %v1431 = vadd.f32 %v1429, %v1430
    %v1432 = vrot.slane %v1431, 2
    %v1433 = vadd.f32 %v1431, %v1432
    %v1434 = vrot.slane %v1433, 1
    %v1435 = vadd.f32 %v1433, %v1434
    %v1436 = vsel %vm1170, %v1330, 0.0
    %v1437 = vrot.slane %v1436, 4
    %v1438 = vadd.f32 %v1436, %v1437
    %v1439 = vrot.slane %v1438, 2
    %v1440 = vadd.f32 %v1438, %v1439
    %v1441 = vrot.slane %v1440, 1
    %v1442 = vadd.f32 %v1440, %v1441
    %v1443 = vlog2.pop %v1337
    %v1444 = vmul.f32 %v1443, 0.6931472
    %v1445 = vlog2.pop %v1344
    %v1446 = vmul.f32 %v1445, 0.6931472
    %v1447 = vlog2.pop %v1351
    %v1448 = vmul.f32 %v1447, 0.6931472
    %v1449 = vlog2.pop %v1358
    %v1450 = vmul.f32 %v1449, 0.6931472
    %v1451 = vlog2.pop %v1365
    %v1452 = vmul.f32 %v1451, 0.6931472
    %v1453 = vlog2.pop %v1372
    %v1454 = vmul.f32 %v1453, 0.6931472
    %v1455 = vlog2.pop %v1379
    %v1456 = vmul.f32 %v1455, 0.6931472
    %v1457 = vlog2.pop %v1386
    %v1458 = vmul.f32 %v1457, 0.6931472
    %v1459 = vlog2.pop %v1393
    %v1460 = vmul.f32 %v1459, 0.6931472
    %v1461 = vlog2.pop %v1400
    %v1462 = vmul.f32 %v1461, 0.6931472
    %v1463 = vlog2.pop %v1407
    %v1464 = vmul.f32 %v1463, 0.6931472
    %v1465 = vlog2.pop %v1414
    %v1466 = vmul.f32 %v1465, 0.6931472
    %v1467 = vlog2.pop %v1421
    %v1468 = vmul.f32 %v1467, 0.6931472
    %v1469 = vlog2.pop %v1428
    %v1470 = vmul.f32 %v1469, 0.6931472
    %v1471 = vlog2.pop %v1435
    %v1472 = vmul.f32 %v1471, 0.6931472
    %v1473 = vlog2.pop %v1442
    %v1474 = vmul.f32 %v1473, 0.6931472
    %v1475 = vadd.f32 %v1444, %v1177
    %v1476 = vadd.f32 %v1446, %v1184
    %v1477 = vadd.f32 %v1448, %v1191
    %v1478 = vadd.f32 %v1450, %v1198
    %v1479 = vadd.f32 %v1452, %v1205
    %v1480 = vadd.f32 %v1454, %v1212
    %v1481 = vadd.f32 %v1456, %v1219
    %v1482 = vadd.f32 %v1458, %v1226
    %v1483 = vadd.f32 %v1460, %v1233
    %v1484 = vadd.f32 %v1462, %v1240
    %v1485 = vadd.f32 %v1464, %v1247
    %v1486 = vadd.f32 %v1466, %v1254
    %v1487 = vadd.f32 %v1468, %v1261
    %v1488 = vadd.f32 %v1470, %v1268
    %v1489 = vadd.f32 %v1472, %v1275
    %v1490 = vadd.f32 %v1474, %v1282
    %v1491 = vsub.f32 0.0, %v1475
    %v1492 = vsub.f32 0.0, %v1476
    %v1493 = vsub.f32 0.0, %v1477
    %v1494 = vsub.f32 0.0, %v1478
    %v1495 = vsub.f32 0.0, %v1479
    %v1496 = vsub.f32 0.0, %v1480
    %v1497 = vsub.f32 0.0, %v1481
    %v1498 = vsub.f32 0.0, %v1482
    %v1499 = vsub.f32 0.0, %v1483
    %v1500 = vsub.f32 0.0, %v1484
    %v1501 = vsub.f32 0.0, %v1485
    %v1502 = vsub.f32 0.0, %v1486
    %v1503 = vsub.f32 0.0, %v1487
    %v1504 = vsub.f32 0.0, %v1488
    %v1505 = vsub.f32 0.0, %v1489
    %v1506 = vsub.f32 0.0, %v1490
    %v1507 = vmax.f32 %v1491, %v1495
    %v1508 = vmax.f32 %v1492, %v1496
    %v1509 = vmax.f32 %v1493, %v1497
    %v1510 = vmax.f32 %v1494, %v1498
    %v1511 = vmax.f32 %v1507, %v1499
    %v1512 = vmax.f32 %v1508, %v1500
    %v1513 = vmax.f32 %v1509, %v1501
    %v1514 = vmax.f32 %v1510, %v1502
    %v1515 = vmax.f32 %v1511, %v1503
    %v1516 = vmax.f32 %v1512, %v1504
    %v1517 = vmax.f32 %v1513, %v1505
    %v1518 = vmax.f32 %v1514, %v1506
    %v1519 = vmax.f32 %v1515, %v1516
    %v1520 = vmax.f32 %v1517, %v1518
    %v1521 = vmax.f32 %v1519, %v1520
    %v1522 = vsub.f32 %v1491, %v1521
    %v1523 = vsub.f32 %v1492, %v1521
    %v1524 = vsub.f32 %v1493, %v1521
    %v1525 = vsub.f32 %v1494, %v1521
    %v1526 = vsub.f32 %v1495, %v1521
    %v1527 = vsub.f32 %v1496, %v1521
    %v1528 = vsub.f32 %v1497, %v1521
    %v1529 = vsub.f32 %v1498, %v1521
    %v1530 = vsub.f32 %v1499, %v1521
    %v1531 = vsub.f32 %v1500, %v1521
    %v1532 = vsub.f32 %v1501, %v1521
    %v1533 = vsub.f32 %v1502, %v1521
    %v1534 = vsub.f32 %v1503, %v1521
    %v1535 = vsub.f32 %v1504, %v1521
    %v1536 = vsub.f32 %v1505, %v1521
    %v1537 = vsub.f32 %v1506, %v1521
    %v1538 = vmul.f32 %v1522, 1.442695
    %v1539 = vpow.pop %v1538
    %v1540 = vmul.f32 %v1523, 1.442695
    %v1541 = vpow.pop %v1540
    %v1542 = vmul.f32 %v1524, 1.442695
    %v1543 = vpow.pop %v1542
    %v1544 = vmul.f32 %v1525, 1.442695
    %v1545 = vpow.pop %v1544
    %v1546 = vmul.f32 %v1526, 1.442695
    %v1547 = vpow.pop %v1546
    %v1548 = vmul.f32 %v1527, 1.442695
    %v1549 = vpow.pop %v1548
    %v1550 = vmul.f32 %v1528, 1.442695
    %v1551 = vpow.pop %v1550
    %v1552 = vmul.f32 %v1529, 1.442695
    %v1553 = vpow.pop %v1552
    %v1554 = vmul.f32 %v1530, 1.442695
    %v1555 = vpow.pop %v1554
    %v1556 = vmul.f32 %v1531, 1.442695
    %v1557 = vpow.pop %v1556
    %v1558 = vmul.f32 %v1532, 1.442695
    %v1559 = vpow.pop %v1558
    %v1560 = vmul.f32 %v1533, 1.442695
    %v1561 = vpow.pop %v1560
    %v1562 = vmul.f32 %v1534, 1.442695
    %v1563 = vpow.pop %v1562
    %v1564 = vmul.f32 %v1535, 1.442695
    %v1565 = vpow.pop %v1564
    %v1566 = vmul.f32 %v1536, 1.442695
    %v1567 = vpow.pop %v1566
    %v1568 = vmul.f32 %v1537, 1.442695
    %v1569 = vpow.pop %v1568
    %v1586 = vrot.slane %v1541, 7
    %v1587 = vsel %vm1087, %v1586, %v1539
    %v1588 = vrot.slane %v1543, 6
    %v1589 = vsel %vm1089, %v1588, %v1587
    %v1590 = vrot.slane %v1545, 5
    %v1591 = vsel %vm1091, %v1590, %v1589
    %v1592 = vrot.slane %v1547, 4
    %vm1593 = vcmask 1044484
    %v1594 = vsel %vm1593, %v1592, %v1591
    %v1595 = vrot.slane %v1549, 3
    %vm1596 = vcmask 1045509
    %v1597 = vsel %vm1596, %v1595, %v1594
    %v1598 = vrot.slane %v1551, 2
    %vm1599 = vcmask 1046534
    %v1600 = vsel %vm1599, %v1598, %v1597
    %v1601 = vrot.slane %v1553, 1
    %vm1602 = vcmask 1047559
    %v1603 = vsel %vm1602, %v1601, %v1600
    %v1604 = vrot.slane %v1557, 7
    %v1605 = vsel %vm1087, %v1604, %v1555
    %v1606 = vrot.slane %v1559, 6
    %v1607 = vsel %vm1089, %v1606, %v1605
    %v1608 = vrot.slane %v1561, 5
    %v1609 = vsel %vm1091, %v1608, %v1607
    %v1610 = vrot.slane %v1563, 4
    %v1611 = vsel %vm1593, %v1610, %v1609
    %v1612 = vrot.slane %v1565, 3
    %v1613 = vsel %vm1596, %v1612, %v1611
    %v1614 = vrot.slane %v1567, 2
    %v1615 = vsel %vm1599, %v1614, %v1613
    %v1616 = vrot.slane %v1569, 1
    %v1617 = vsel %vm1602, %v1616, %v1615
    %v1620 = vadd.f32 %v1603, %v1617
    %v1621 = vrot.slane %v1620, 4
    %v1622 = vadd.f32 %v1620, %v1621
    %v1623 = vrot.slane %v1622, 2
    %v1624 = vadd.f32 %v1622, %v1623
    %v1625 = vrot.slane %v1624, 1
    %v1626 = vadd.f32 %v1624, %v1625
    %v1627 = vlog2.pop %v1626
    %v1628 = vmul.f32 %v1627, 0.6931472
    %v1629 = vadd.f32 %v1628, %v1521
    %v1630 = vadd.f32 %v79, %v120
    %v1631 = vadd.f32 %v79, %v127
    %v1632 = vadd.f32 %v79, %v134
    %v1633 = vadd.f32 %v79, %v141
    %v1634 = vsub.f32 %v72, %v148
    %v1635 = vsub.f32 %v72, %v155
    %v1636 = vsub.f32 %v72, %v162
    %v1637 = vsub.f32 %v72, %v169
    %v1638 = vlog2.pop %v1630
    %v1639 = vmul.f32 %v1638, 0.6931472
    %v1640 = vlog2.pop %v1631
    %v1641 = vmul.f32 %v1640, 0.6931472
    %v1642 = vlog2.pop %v1632
    %v1643 = vmul.f32 %v1642, 0.6931472
    %v1644 = vlog2.pop %v1633
    %v1645 = vmul.f32 %v1644, 0.6931472
    %v1646 = vadd.f32 %v1639, 1.837877
    %v1647 = vadd.f32 %v1641, 1.837877
    %v1648 = vadd.f32 %v1643, 1.837877
    %v1649 = vadd.f32 %v1645, 1.837877
    %v1650 = vmul.f32 %v1634, %v1634
    %v1651 = vmul.f32 %v1635, %v1635
    %v1652 = vmul.f32 %v1636, %v1636
    %v1653 = vmul.f32 %v1637, %v1637
    %v1654 = vrcp.pop %v1630
    %v1655 = vmul.f32 %v1650, %v1654
    %v1656 = vrcp.pop %v1631
    %v1657 = vmul.f32 %v1651, %v1656
    %v1658 = vrcp.pop %v1632
    %v1659 = vmul.f32 %v1652, %v1658
    %v1660 = vrcp.pop %v1633
    %v1661 = vmul.f32 %v1653, %v1660
    %v1662 = vadd.f32 %v1646, %v1655
    %v1663 = vadd.f32 %v1647, %v1657
    %v1664 = vadd.f32 %v1648, %v1659
    %v1665 = vadd.f32 %v1649, %v1661
    %v1666 = vrot.slane %v1662, 4
    %v1667 = vadd.f32 %v1662, %v1666
    %v1668 = vrot.slane %v1667, 2
    %v1669 = vadd.f32 %v1667, %v1668
    %v1670 = vrot.slane %v1669, 1
    %v1671 = vadd.f32 %v1669, %v1670
    %v1672 = vrot.slane %v1663, 4
    %v1673 = vadd.f32 %v1663, %v1672
    %v1674 = vrot.slane %v1673, 2
    %v1675 = vadd.f32 %v1673, %v1674
    %v1676 = vrot.slane %v1675, 1
    %v1677 = vadd.f32 %v1675, %v1676
    %v1678 = vrot.slane %v1664, 4
    %v1679 = vadd.f32 %v1664, %v1678
    %v1680 = vrot.slane %v1679, 2
    %v1681 = vadd.f32 %v1679, %v1680
    %v1682 = vrot.slane %v1681, 1
    %v1683 = vadd.f32 %v1681, %v1682
    %v1684 = vrot.slane %v1665, 4
    %v1685 = vadd.f32 %v1665, %v1684
    %v1686 = vrot.slane %v1685, 2
    %v1687 = vadd.f32 %v1685, %v1686
    %v1688 = vrot.slane %v1687, 1
    %v1689 = vadd.f32 %v1687, %v1688
    %v1690 = vmul.f32 %v1671, -0.5
    %v1691 = vmul.f32 %v1677, -0.5
    %v1692 = vmul.f32 %v1683, -0.5
    %v1693 = vmul.f32 %v1689, -0.5
    %v1694 = vlaneseq
    %v1695 = vshrl.u32 %v1694, 7
    %v1696 = vsub.s32 0, %v1695
    %v1697 = vrot.slane %v1629, %v1696
    %v1698 = vadd.f32 %v1690, %v1697
    %v1699 = vadd.f32 %v1691, %v1697
    %v1700 = vadd.f32 %v1692, %v1697
    %v1701 = vadd.f32 %v1693, %v1697
    %v1702 = vsub.f32 %v1698, 2.7725887
    %v1703 = vsub.f32 %v1699, 2.7725887
    %v1704 = vsub.f32 %v1700, 2.7725887
    %v1705 = vsub.f32 %v1701, 2.7725887
    %v1710 = vrot.slane %v1703, 7
    %v1711 = vsel %vm1087, %v1710, %v1702
    %v1712 = vrot.slane %v1704, 6
    %v1713 = vsel %vm1089, %v1712, %v1711
    %v1714 = vrot.slane %v1705, 5
    %v1715 = vsel %vm1091, %v1714, %v1713
    %1717 = vst [vmem:[#allocation10] sm:$0xf] %v1715
    // Predicated region
    $region38: #{tpu_custom_call.1} parent=1 // pred_check
      _
    $region39: #{tpu_custom_call.1} parent=1 // pred_check_branch
      %1719 = sbr.rel (0) target = $region41
    $region40: #{tpu_custom_call.1} parent=1 // pred_region
      %s1721 = ssub.s32 64, 64
      %1722 = vsyncadd [#allocation4], %s1721
      %s1724 = sshll.u32 [#allocation10], 4
      %s1725 = int_to_ptr.vmem [resolvable:$true] %s1724
      %1727 = dma.vmem_to_hbm [thread:$0]  %s1725, 64, %s5, [#allocation4]
    $region41: #{tpu_custom_call.1} parent=1 // pred_fallthru
      _
    // Predicated region
    $region42: #{tpu_custom_call.1} parent=1 // pred_check
      _
    $region43: #{tpu_custom_call.1} parent=1 // pred_check_branch
      %1729 = sbr.rel (0) target = $region45
    $region44: #{tpu_custom_call.1} parent=1 // pred_region
      %1730 = dma.done [#allocation4], 64
    $region45: #{tpu_custom_call.1} parent=1 // pred_fallthru
      _
    %1731 = vsyncpa [#allocation3], 1
    %1732 = vsyncpa [#allocation6], 1
    %1733 = vsyncpa [#allocation9], 1
    %1734 = vsyncpa [#allocation4], 1

</llo_original>
